<compile_context>
chip_gen: v6e
topology: v6e:2x2x1
jax: 0.10.0
libtpu: 0.0.40
codegen_flags: <defaults>
</compile_context>

<pallas_src>
import functools

import jax
import jax.numpy as jnp
from jax.experimental import pallas as pl
from jax.experimental.pallas import tpu as pltpu


# ------------------------------- kernel ------------------------------------ #

def cbam_kernel(x_ref, w1_ref, b1_ref, w2_ref, b2_ref, mask_ref, cw_ref, cb_ref,
                out_ref, pool_ref, *, W):
    # x_ref   : (1, C, HW)  one batch element, input dtype
    # w1_ref  : (Ch, C)     Linear1 weight (out, in)     b1_ref: (Ch, 1)
    # w2_ref  : (C, Ch)     Linear2 weight (out, in)     b2_ref: (C, 1)
    # mask_ref: (7, HW) f32 column-validity masks for the 7 horizontal conv offsets
    # cw_ref  : (98,)  SMEM conv weight (2,7,7) flattened: [49 max taps | 49 mean taps]
    # cb_ref  : (1,)   SMEM conv bias
    # out_ref : (1, C, HW)
    # pool_ref: VMEM scratch (2, HW + 6*W + 6) f32: zero-padded flat pooled maps
    C, HW = x_ref.shape[1], x_ref.shape[2]
    x = x_ref[0]                                                     # (C, HW)

    # ---- Channel attention: global avg/max pool over HW (lane reduce) + shared MLP ----
    avg = jnp.sum(x.astype(jnp.float32), axis=1, keepdims=True) * (1.0 / HW)   # (C, 1)
    mx = jnp.max(x, axis=1, keepdims=True).astype(jnp.float32)                 # (C, 1)
    lane = jax.lax.broadcasted_iota(jnp.int32, (C, 2), 1)
    stats = jnp.where(lane == 0, avg, mx)                            # (C, 2): [avg | max]
    h = jnp.dot(w1_ref[...], stats, preferred_element_type=jnp.float32) + b1_ref[...]
    h = jnp.maximum(h, 0.0)                                          # (Ch, 2)
    o = jnp.dot(w2_ref[...], h, preferred_element_type=jnp.float32) + b2_ref[...]
    y = jax.nn.sigmoid(o[:, 0:1] + o[:, 1:2])                        # (C, 1) channel scale

    c_att = x * y.astype(x.dtype)                                    # (C, HW), VMEM only

    # ---- Spatial attention: ChannelPool (max/mean over C) + 7x7 conv + sigmoid ----
    pmax = jnp.max(c_att, axis=0, keepdims=True).astype(jnp.float32)               # (1, HW)
    pmean = jnp.sum(c_att.astype(jnp.float32), axis=0, keepdims=True) * (1.0 / C)  # (1, HW)

    P = 3 * W + 3                                   # flat offset of pixel (0, 0) in scratch
    pool_ref[...] = jnp.zeros_like(pool_ref)        # zero padding (re-done every grid step)
    pool_ref[0:1, P:P + HW] = pmax
    pool_ref[1:2, P:P + HW] = pmean

    # tap (dy, dx) of output pixel i reads padded_flat[i + dy*W + dx]; column wrap across
    # row boundaries is zeroed by mask_ref[dx].
    acc = jnp.zeros((1, HW), jnp.float32)
    for dx in range(7):
        part = jnp.zeros((1, HW), jnp.float32)
        for dy in range(7):
            start = dy * W + dx                                      # static slice start
            tap = pool_ref[:, start:start + HW]                      # (2, HW)
            part = part + cw_ref[dy * 7 + dx] * tap[0:1, :] \
                        + cw_ref[49 + dy * 7 + dx] * tap[1:2, :]
        acc = acc + part * mask_ref[dx:dx + 1, :]
    s = jax.nn.sigmoid(acc + cb_ref[0])                              # (1, HW) spatial scale

    out_ref[0] = (c_att * s.astype(c_att.dtype)).astype(out_ref.dtype)


# ------------------------------- wrapper ------------------------------------ #

def cbam_forward(x, params):
    B, C, H, W = x.shape
    HW = H * W
    Ch = params["w1"].shape[0]
    x_flat = x.reshape(B, C, HW)                     # free view of contiguous NCHW

    # Column-validity masks for the 7 horizontal conv offsets (tiny, host precomputed).
    col = jnp.arange(HW, dtype=jnp.int32) % W
    colmask = jnp.stack(
        [((col + (dx - 3) >= 0) & (col + (dx - 3) < W)).astype(jnp.float32)
         for dx in range(7)], axis=0)                # (7, HW)

    smem = pl.BlockSpec(memory_space=pltpu.MemorySpace.SMEM)
    out_flat = pl.pallas_call(
        functools.partial(cbam_kernel, W=W),
        out_shape=jax.ShapeDtypeStruct((B, C, HW), x.dtype),
        grid_spec=pltpu.PrefetchScalarGridSpec(
            num_scalar_prefetch=0,
            grid=(B,),
            in_specs=[
                pl.BlockSpec((1, C, HW), lambda b: (b, 0, 0)),   # x (one batch element)
                pl.BlockSpec((Ch, C), lambda b: (0, 0)),         # w1
                pl.BlockSpec((Ch, 1), lambda b: (0, 0)),         # b1
                pl.BlockSpec((C, Ch), lambda b: (0, 0)),         # w2
                pl.BlockSpec((C, 1), lambda b: (0, 0)),          # b2
                pl.BlockSpec((7, HW), lambda b: (0, 0)),         # column masks
                smem,                                            # conv weight (98,)
                smem,                                            # conv bias   (1,)
            ],
            out_specs=pl.BlockSpec((1, C, HW), lambda b: (b, 0, 0)),
            scratch_shapes=[pltpu.VMEM((2, HW + 6 * W + 6), jnp.float32)],
        ),
        compiler_params=pltpu.CompilerParams(
            dimension_semantics=("parallel",),
            vmem_limit_bytes=32 * 1024 * 1024,
        ),
    )(x_flat, params["w1"], params["b1"], params["w2"], params["b2"],
      colmask, params["conv_w"], params["conv_b"])
    return out_flat.reshape(B, C, H, W)


# --------------------------- params & reference ----------------------------- #

def init_params(key, C, reduction=16):
    hidden = max(1, int(C // reduction))
    ks = jax.random.split(key, 6)
    return dict(
        w1=jax.random.normal(ks[0], (hidden, C), jnp.float32) * 0.2,   # Linear1 weight (out, in)
        b1=jax.random.normal(ks[1], (hidden, 1), jnp.float32) * 0.1,   # Linear1 bias
        w2=jax.random.normal(ks[2], (C, hidden), jnp.float32) * 0.2,   # Linear2 weight (out, in)
        b2=jax.random.normal(ks[3], (C, 1), jnp.float32) * 0.1,        # Linear2 bias
        conv_w=jax.random.normal(ks[4], (98,), jnp.float32) * 0.1,     # Conv2d(2,1,7,7) flattened
        conv_b=jax.random.normal(ks[5], (1,), jnp.float32) * 0.1,      # Conv2d bias
    )


def cbam_reference(x, p):
    avg = x.mean(axis=(2, 3))
    mx = x.max(axis=(2, 3))

    def fc(v):
        h = jnp.maximum(v @ p["w1"].T + p["b1"][:, 0], 0.0)
        return h @ p["w2"].T + p["b2"][:, 0]

    y = jax.nn.sigmoid(fc(avg) + fc(mx))
    c_att = x * y[:, :, None, None]

    pooled = jnp.stack([c_att.max(axis=1), c_att.mean(axis=1)], axis=1)   # (B, 2, H, W)
    w = p["conv_w"].reshape(1, 2, 7, 7)
    s = jax.lax.conv_general_dilated(
        pooled, w, window_strides=(1, 1), padding=((3, 3), (3, 3)),
        dimension_numbers=("NCHW", "OIHW", "NCHW"))
    s = jax.nn.sigmoid(s + p["conv_b"][0])
    return c_att * s


# --------------------------------- main -------------------------------------- #

if __name__ == "__main__":
    key = jax.random.PRNGKey(0)
    kx, kp = jax.random.split(key)

    B, C, H, W = 2, 32, 16, 16          # reduction=16 -> hidden dim 2
    x = jax.random.normal(kx, (B, C, H, W), jnp.float32)
    params = init_params(kp, C, reduction=16)

    out = jax.jit(cbam_forward)(x, params)
    out = jax.block_until_ready(out)

    ref = jax.block_until_ready(cbam_reference(x, params))
    assert out.shape == (B, C, H, W)
    assert jnp.allclose(out, ref, rtol=1e-4, atol=1e-5), "Pallas CBAM mismatch vs reference"

    print("KERNEL_OK")
</pallas_src>

<mosaic_0001>
module attributes {stable_mosaic.version = 11 : i64} {
  func.func @cbam_kernel(%arg0: i32, %arg1: memref<1x32x256xf32, #tpu.memory_space<vmem>>, %arg2: memref<2x32xf32, #tpu.memory_space<vmem>>, %arg3: memref<2x1xf32, #tpu.memory_space<vmem>>, %arg4: memref<32x2xf32, #tpu.memory_space<vmem>>, %arg5: memref<32x1xf32, #tpu.memory_space<vmem>>, %arg6: memref<7x256xf32, #tpu.memory_space<vmem>>, %arg7: memref<98xf32, #tpu.memory_space<smem>>, %arg8: memref<1xf32, #tpu.memory_space<smem>>, %arg9: memref<1x32x256xf32, #tpu.memory_space<vmem>>, %arg10: memref<2x358xf32, #tpu.memory_space<vmem>>) attributes {dimension_semantics = [#tpu.dimension_semantics<parallel>], iteration_bounds = array<i64: 2>, scalar_prefetch = 0 : i64, scratch_operands = 1 : i64, tpu.core_type = #tpu.core_type<tc>, window_params = [{transform_indices = @transform_0, window_bounds = array<i64: 1, 32, 256>}, {pipeline_mode = #tpu.pipeline_mode<synchronous>, transform_indices = @transform_1, window_bounds = array<i64: 2, 32>}, {pipeline_mode = #tpu.pipeline_mode<synchronous>, transform_indices = @transform_2, window_bounds = array<i64: 2, 1>}, {pipeline_mode = #tpu.pipeline_mode<synchronous>, transform_indices = @transform_3, window_bounds = array<i64: 32, 2>}, {pipeline_mode = #tpu.pipeline_mode<synchronous>, transform_indices = @transform_4, window_bounds = array<i64: 32, 1>}, {pipeline_mode = #tpu.pipeline_mode<synchronous>, transform_indices = @transform_5, window_bounds = array<i64: 7, 256>}, {transform_indices = @transform_6, window_bounds = array<i64: 98>}, {transform_indices = @transform_7, window_bounds = array<i64: 1>}, {transform_indices = @transform_8, window_bounds = array<i64: 1, 32, 256>}]} {
    %c0 = arith.constant 0 : index
    %c0_0 = arith.constant 0 : index
    %c0_1 = arith.constant 0 : index
    %0 = vector.load %arg1[%c0, %c0_0, %c0_1] : memref<1x32x256xf32, #tpu.memory_space<vmem>>, vector<1x32x256xf32>
    %1 = vector.shape_cast %0 : vector<1x32x256xf32> to vector<32x256xf32>
    %cst = arith.constant dense<0.000000e+00> : vector<32xf32>
    %2 = vector.multi_reduction <add>, %1, %cst [1] : vector<32x256xf32> to vector<32xf32>
    %3 = vector.shape_cast %2 : vector<32xf32> to vector<32x1xf32>
    %cst_2 = arith.constant 3.906250e-03 : f32
    %4 = vector.broadcast %cst_2 : f32 to vector<32x1xf32>
    %5 = arith.mulf %3, %4 : vector<32x1xf32>
    %cst_3 = arith.constant dense<0xFF800000> : vector<32xf32>
    %6 = vector.multi_reduction <maximumf>, %1, %cst_3 [1] : vector<32x256xf32> to vector<32xf32>
    %7 = vector.shape_cast %6 : vector<32xf32> to vector<32x1xf32>
    %8 = tpu.iota {dimensions = array<i32: 1>} : vector<32x2xi32>
    %c0_i32 = arith.constant 0 : i32
    %9 = vector.broadcast %c0_i32 : i32 to vector<32x2xi32>
    %10 = arith.cmpi eq, %8, %9 : vector<32x2xi32>
    %11 = vector.shape_cast %5 : vector<32x1xf32> to vector<32x1xf32>
    %12 = vector.broadcast %11 : vector<32x1xf32> to vector<32x2xf32>
    %13 = vector.shape_cast %7 : vector<32x1xf32> to vector<32x1xf32>
    %14 = vector.broadcast %13 : vector<32x1xf32> to vector<32x2xf32>
    %15 = arith.select %10, %12, %14 : vector<32x2xi1>, vector<32x2xf32>
    %c0_4 = arith.constant 0 : index
    %c0_5 = arith.constant 0 : index
    %16 = vector.load %arg2[%c0_4, %c0_5] : memref<2x32xf32, #tpu.memory_space<vmem>>, vector<2x32xf32>
    %cst_6 = arith.constant dense<0.000000e+00> : vector<2x2xf32>
    %17 = tpu.matmul %16, %15, %cst_6 {dimension_numbers = #tpu.dot_dimension_numbers<[1], [0], [0], [1], [0, 0, 1, 1], [], []>} : vector<2x32xf32>, vector<32x2xf32>, vector<2x2xf32> -> vector<2x2xf32>
    %c0_7 = arith.constant 0 : index
    %c0_8 = arith.constant 0 : index
    %18 = vector.load %arg3[%c0_7, %c0_8] : memref<2x1xf32, #tpu.memory_space<vmem>>, vector<2x1xf32>
    %19 = vector.broadcast %18 : vector<2x1xf32> to vector<2x2xf32>
    %20 = arith.addf %17, %19 : vector<2x2xf32>
    %cst_9 = arith.constant 0.000000e+00 : f32
    %21 = vector.broadcast %cst_9 : f32 to vector<2x2xf32>
    %22 = arith.maximumf %20, %21 : vector<2x2xf32>
    %c0_10 = arith.constant 0 : index
    %c0_11 = arith.constant 0 : index
    %23 = vector.load %arg4[%c0_10, %c0_11] : memref<32x2xf32, #tpu.memory_space<vmem>>, vector<32x2xf32>
    %cst_12 = arith.constant dense<0.000000e+00> : vector<32x2xf32>
    %24 = tpu.matmul %23, %22, %cst_12 {dimension_numbers = #tpu.dot_dimension_numbers<[1], [0], [0], [1], [0, 0, 1, 1], [], []>} : vector<32x2xf32>, vector<2x2xf32>, vector<32x2xf32> -> vector<32x2xf32>
    %c0_13 = arith.constant 0 : index
    %c0_14 = arith.constant 0 : index
    %25 = vector.load %arg5[%c0_13, %c0_14] : memref<32x1xf32, #tpu.memory_space<vmem>>, vector<32x1xf32>
    %26 = vector.broadcast %25 : vector<32x1xf32> to vector<32x2xf32>
    %27 = arith.addf %24, %26 : vector<32x2xf32>
    %28 = vector.extract_strided_slice %27 {offsets = [0, 0], sizes = [32, 1], strides = [1, 1]} : vector<32x2xf32> to vector<32x1xf32>
    %29 = vector.extract_strided_slice %27 {offsets = [0, 1], sizes = [32, 1], strides = [1, 1]} : vector<32x2xf32> to vector<32x1xf32>
    %30 = arith.addf %28, %29 : vector<32x1xf32>
    %31 = arith.negf %30 : vector<32x1xf32>
    %32 = math.exp %31 : vector<32x1xf32>
    %cst_15 = arith.constant 1.000000e+00 : f32
    %33 = vector.broadcast %cst_15 : f32 to vector<32x1xf32>
    %34 = arith.addf %33, %32 : vector<32x1xf32>
    %35 = arith.divf %33, %34 : vector<32x1xf32>
    %36 = vector.broadcast %35 : vector<32x1xf32> to vector<32x256xf32>
    %37 = arith.mulf %1, %36 : vector<32x256xf32>
    %cst_16 = arith.constant dense<0xFF800000> : vector<256xf32>
    %38 = vector.multi_reduction <maximumf>, %37, %cst_16 [0] : vector<32x256xf32> to vector<256xf32>
    %39 = vector.shape_cast %38 : vector<256xf32> to vector<1x256xf32>
    %cst_17 = arith.constant dense<0.000000e+00> : vector<256xf32>
    %40 = vector.multi_reduction <add>, %37, %cst_17 [0] : vector<32x256xf32> to vector<256xf32>
    %41 = vector.shape_cast %40 : vector<256xf32> to vector<1x256xf32>
    %cst_18 = arith.constant 3.125000e-02 : f32
    %42 = vector.broadcast %cst_18 : f32 to vector<1x256xf32>
    %43 = arith.mulf %41, %42 : vector<1x256xf32>
    %cst_19 = arith.constant 0.000000e+00 : f32
    %44 = vector.broadcast %cst_19 : f32 to vector<2x358xf32>
    %c0_20 = arith.constant 0 : index
    %c0_21 = arith.constant 0 : index
    %45 = vector.load %arg10[%c0_20, %c0_21] : memref<2x358xf32, #tpu.memory_space<vmem>>, vector<2x358xf32>
    tpu.vector_store %arg10[%c0_20, %c0_21], %44 {strides = array<i32>} : memref<2x358xf32, #tpu.memory_space<vmem>>, vector<2x358xf32>,
    %c0_22 = arith.constant 0 : index
    %c51 = arith.constant 51 : index
    %46 = vector.load %arg10[%c0_22, %c51] : memref<2x358xf32, #tpu.memory_space<vmem>>, vector<1x256xf32>
    tpu.vector_store %arg10[%c0_22, %c51], %39 {strides = array<i32>} : memref<2x358xf32, #tpu.memory_space<vmem>>, vector<1x256xf32>,
    %c1 = arith.constant 1 : index
    %c51_23 = arith.constant 51 : index
    %47 = vector.load %arg10[%c1, %c51_23] : memref<2x358xf32, #tpu.memory_space<vmem>>, vector<1x256xf32>
    tpu.vector_store %arg10[%c1, %c51_23], %43 {strides = array<i32>} : memref<2x358xf32, #tpu.memory_space<vmem>>, vector<1x256xf32>,
    %cst_24 = arith.constant 0.000000e+00 : f32
    %48 = vector.broadcast %cst_24 : f32 to vector<1x256xf32>
    %cst_25 = arith.constant 0.000000e+00 : f32
    %49 = vector.broadcast %cst_25 : f32 to vector<1x256xf32>
    %c0_26 = arith.constant 0 : index
    %c0_27 = arith.constant 0 : index
    %50 = vector.load %arg10[%c0_26, %c0_27] : memref<2x358xf32, #tpu.memory_space<vmem>>, vector<2x256xf32>
    %c0_28 = arith.constant 0 : index
    %51 = memref.load %arg7[%c0_28] : memref<98xf32, #tpu.memory_space<smem>>
    %52 = vector.extract_strided_slice %50 {offsets = [0, 0], sizes = [1, 256], strides = [1, 1]} : vector<2x256xf32> to vector<1x256xf32>
    %53 = vector.broadcast %51 : f32 to vector<1x256xf32>
    %54 = arith.mulf %53, %52 : vector<1x256xf32>
    %55 = arith.addf %49, %54 : vector<1x256xf32>
    %c49 = arith.constant 49 : index
    %56 = memref.load %arg7[%c49] : memref<98xf32, #tpu.memory_space<smem>>
    %57 = vector.extract_strided_slice %50 {offsets = [1, 0], sizes = [1, 256], strides = [1, 1]} : vector<2x256xf32> to vector<1x256xf32>
    %58 = vector.broadcast %56 : f32 to vector<1x256xf32>
    %59 = arith.mulf %58, %57 : vector<1x256xf32>
    %60 = arith.addf %55, %59 : vector<1x256xf32>
    %c0_29 = arith.constant 0 : index
    %c16 = arith.constant 16 : index
    %61 = vector.load %arg10[%c0_29, %c16] : memref<2x358xf32, #tpu.memory_space<vmem>>, vector<2x256xf32>
    %c7 = arith.constant 7 : index
    %62 = memref.load %arg7[%c7] : memref<98xf32, #tpu.memory_space<smem>>
    %63 = vector.extract_strided_slice %61 {offsets = [0, 0], sizes = [1, 256], strides = [1, 1]} : vector<2x256xf32> to vector<1x256xf32>
    %64 = vector.broadcast %62 : f32 to vector<1x256xf32>
    %65 = arith.mulf %64, %63 : vector<1x256xf32>
    %66 = arith.addf %60, %65 : vector<1x256xf32>
    %c56 = arith.constant 56 : index
    %67 = memref.load %arg7[%c56] : memref<98xf32, #tpu.memory_space<smem>>
    %68 = vector.extract_strided_slice %61 {offsets = [1, 0], sizes = [1, 256], strides = [1, 1]} : vector<2x256xf32> to vector<1x256xf32>
    %69 = vector.broadcast %67 : f32 to vector<1x256xf32>
    %70 = arith.mulf %69, %68 : vector<1x256xf32>
    %71 = arith.addf %66, %70 : vector<1x256xf32>
    %c0_30 = arith.constant 0 : index
    %c32 = arith.constant 32 : index
    %72 = vector.load %arg10[%c0_30, %c32] : memref<2x358xf32, #tpu.memory_space<vmem>>, vector<2x256xf32>
    %c14 = arith.constant 14 : index
    %73 = memref.load %arg7[%c14] : memref<98xf32, #tpu.memory_space<smem>>
    %74 = vector.extract_strided_slice %72 {offsets = [0, 0], sizes = [1, 256], strides = [1, 1]} : vector<2x256xf32> to vector<1x256xf32>
    %75 = vector.broadcast %73 : f32 to vector<1x256xf32>
    %76 = arith.mulf %75, %74 : vector<1x256xf32>
    %77 = arith.addf %71, %76 : vector<1x256xf32>
    %c63 = arith.constant 63 : index
    %78 = memref.load %arg7[%c63] : memref<98xf32, #tpu.memory_space<smem>>
    %79 = vector.extract_strided_slice %72 {offsets = [1, 0], sizes = [1, 256], strides = [1, 1]} : vector<2x256xf32> to vector<1x256xf32>
    %80 = vector.broadcast %78 : f32 to vector<1x256xf32>
    %81 = arith.mulf %80, %79 : vector<1x256xf32>
    %82 = arith.addf %77, %81 : vector<1x256xf32>
    %c0_31 = arith.constant 0 : index
    %c48 = arith.constant 48 : index
    %83 = vector.load %arg10[%c0_31, %c48] : memref<2x358xf32, #tpu.memory_space<vmem>>, vector<2x256xf32>
    %c21 = arith.constant 21 : index
    %84 = memref.load %arg7[%c21] : memref<98xf32, #tpu.memory_space<smem>>
    %85 = vector.extract_strided_slice %83 {offsets = [0, 0], sizes = [1, 256], strides = [1, 1]} : vector<2x256xf32> to vector<1x256xf32>
    %86 = vector.broadcast %84 : f32 to vector<1x256xf32>
    %87 = arith.mulf %86, %85 : vector<1x256xf32>
    %88 = arith.addf %82, %87 : vector<1x256xf32>
    %c70 = arith.constant 70 : index
    %89 = memref.load %arg7[%c70] : memref<98xf32, #tpu.memory_space<smem>>
    %90 = vector.extract_strided_slice %83 {offsets = [1, 0], sizes = [1, 256], strides = [1, 1]} : vector<2x256xf32> to vector<1x256xf32>
    %91 = vector.broadcast %89 : f32 to vector<1x256xf32>
    %92 = arith.mulf %91, %90 : vector<1x256xf32>
    %93 = arith.addf %88, %92 : vector<1x256xf32>
    %c0_32 = arith.constant 0 : index
    %c64 = arith.constant 64 : index
    %94 = vector.load %arg10[%c0_32, %c64] : memref<2x358xf32, #tpu.memory_space<vmem>>, vector<2x256xf32>
    %c28 = arith.constant 28 : index
    %95 = memref.load %arg7[%c28] : memref<98xf32, #tpu.memory_space<smem>>
    %96 = vector.extract_strided_slice %94 {offsets = [0, 0], sizes = [1, 256], strides = [1, 1]} : vector<2x256xf32> to vector<1x256xf32>
    %97 = vector.broadcast %95 : f32 to vector<1x256xf32>
    %98 = arith.mulf %97, %96 : vector<1x256xf32>
    %99 = arith.addf %93, %98 : vector<1x256xf32>
    %c77 = arith.constant 77 : index
    %100 = memref.load %arg7[%c77] : memref<98xf32, #tpu.memory_space<smem>>
    %101 = vector.extract_strided_slice %94 {offsets = [1, 0], sizes = [1, 256], strides = [1, 1]} : vector<2x256xf32> to vector<1x256xf32>
    %102 = vector.broadcast %100 : f32 to vector<1x256xf32>
    %103 = arith.mulf %102, %101 : vector<1x256xf32>
    %104 = arith.addf %99, %103 : vector<1x256xf32>
    %c0_33 = arith.constant 0 : index
    %c80 = arith.constant 80 : index
    %105 = vector.load %arg10[%c0_33, %c80] : memref<2x358xf32, #tpu.memory_space<vmem>>, vector<2x256xf32>
    %c35 = arith.constant 35 : index
    %106 = memref.load %arg7[%c35] : memref<98xf32, #tpu.memory_space<smem>>
    %107 = vector.extract_strided_slice %105 {offsets = [0, 0], sizes = [1, 256], strides = [1, 1]} : vector<2x256xf32> to vector<1x256xf32>
    %108 = vector.broadcast %106 : f32 to vector<1x256xf32>
    %109 = arith.mulf %108, %107 : vector<1x256xf32>
    %110 = arith.addf %104, %109 : vector<1x256xf32>
    %c84 = arith.constant 84 : index
    %111 = memref.load %arg7[%c84] : memref<98xf32, #tpu.memory_space<smem>>
    %112 = vector.extract_strided_slice %105 {offsets = [1, 0], sizes = [1, 256], strides = [1, 1]} : vector<2x256xf32> to vector<1x256xf32>
    %113 = vector.broadcast %111 : f32 to vector<1x256xf32>
    %114 = arith.mulf %113, %112 : vector<1x256xf32>
    %115 = arith.addf %110, %114 : vector<1x256xf32>
    %c0_34 = arith.constant 0 : index
    %c96 = arith.constant 96 : index
    %116 = vector.load %arg10[%c0_34, %c96] : memref<2x358xf32, #tpu.memory_space<vmem>>, vector<2x256xf32>
    %c42 = arith.constant 42 : index
    %117 = memref.load %arg7[%c42] : memref<98xf32, #tpu.memory_space<smem>>
    %118 = vector.extract_strided_slice %116 {offsets = [0, 0], sizes = [1, 256], strides = [1, 1]} : vector<2x256xf32> to vector<1x256xf32>
    %119 = vector.broadcast %117 : f32 to vector<1x256xf32>
    %120 = arith.mulf %119, %118 : vector<1x256xf32>
    %121 = arith.addf %115, %120 : vector<1x256xf32>
    %c91 = arith.constant 91 : index
    %122 = memref.load %arg7[%c91] : memref<98xf32, #tpu.memory_space<smem>>
    %123 = vector.extract_strided_slice %116 {offsets = [1, 0], sizes = [1, 256], strides = [1, 1]} : vector<2x256xf32> to vector<1x256xf32>
    %124 = vector.broadcast %122 : f32 to vector<1x256xf32>
    %125 = arith.mulf %124, %123 : vector<1x256xf32>
    %126 = arith.addf %121, %125 : vector<1x256xf32>
    %c0_35 = arith.constant 0 : index
    %c0_36 = arith.constant 0 : index
    %127 = vector.load %arg6[%c0_35, %c0_36] : memref<7x256xf32, #tpu.memory_space<vmem>>, vector<1x256xf32>
    %128 = arith.mulf %126, %127 : vector<1x256xf32>
    %129 = arith.addf %48, %128 : vector<1x256xf32>
    %cst_37 = arith.constant 0.000000e+00 : f32
    %130 = vector.broadcast %cst_37 : f32 to vector<1x256xf32>
    %c0_38 = arith.constant 0 : index
    %c1_39 = arith.constant 1 : index
    %131 = vector.load %arg10[%c0_38, %c1_39] : memref<2x358xf32, #tpu.memory_space<vmem>>, vector<2x256xf32>
    %c1_40 = arith.constant 1 : index
    %132 = memref.load %arg7[%c1_40] : memref<98xf32, #tpu.memory_space<smem>>
    %133 = vector.extract_strided_slice %131 {offsets = [0, 0], sizes = [1, 256], strides = [1, 1]} : vector<2x256xf32> to vector<1x256xf32>
    %134 = vector.broadcast %132 : f32 to vector<1x256xf32>
    %135 = arith.mulf %134, %133 : vector<1x256xf32>
    %136 = arith.addf %130, %135 : vector<1x256xf32>
    %c50 = arith.constant 50 : index
    %137 = memref.load %arg7[%c50] : memref<98xf32, #tpu.memory_space<smem>>
    %138 = vector.extract_strided_slice %131 {offsets = [1, 0], sizes = [1, 256], strides = [1, 1]} : vector<2x256xf32> to vector<1x256xf32>
    %139 = vector.broadcast %137 : f32 to vector<1x256xf32>
    %140 = arith.mulf %139, %138 : vector<1x256xf32>
    %141 = arith.addf %136, %140 : vector<1x256xf32>
    %c0_41 = arith.constant 0 : index
    %c17 = arith.constant 17 : index
    %142 = vector.load %arg10[%c0_41, %c17] : memref<2x358xf32, #tpu.memory_space<vmem>>, vector<2x256xf32>
    %c8 = arith.constant 8 : index
    %143 = memref.load %arg7[%c8] : memref<98xf32, #tpu.memory_space<smem>>
    %144 = vector.extract_strided_slice %142 {offsets = [0, 0], sizes = [1, 256], strides = [1, 1]} : vector<2x256xf32> to vector<1x256xf32>
    %145 = vector.broadcast %143 : f32 to vector<1x256xf32>
    %146 = arith.mulf %145, %144 : vector<1x256xf32>
    %147 = arith.addf %141, %146 : vector<1x256xf32>
    %c57 = arith.constant 57 : index
    %148 = memref.load %arg7[%c57] : memref<98xf32, #tpu.memory_space<smem>>
    %149 = vector.extract_strided_slice %142 {offsets = [1, 0], sizes = [1, 256], strides = [1, 1]} : vector<2x256xf32> to vector<1x256xf32>
    %150 = vector.broadcast %148 : f32 to vector<1x256xf32>
    %151 = arith.mulf %150, %149 : vector<1x256xf32>
    %152 = arith.addf %147, %151 : vector<1x256xf32>
    %c0_42 = arith.constant 0 : index
    %c33 = arith.constant 33 : index
    %153 = vector.load %arg10[%c0_42, %c33] : memref<2x358xf32, #tpu.memory_space<vmem>>, vector<2x256xf32>
    %c15 = arith.constant 15 : index
    %154 = memref.load %arg7[%c15] : memref<98xf32, #tpu.memory_space<smem>>
    %155 = vector.extract_strided_slice %153 {offsets = [0, 0], sizes = [1, 256], strides = [1, 1]} : vector<2x256xf32> to vector<1x256xf32>
    %156 = vector.broadcast %154 : f32 to vector<1x256xf32>
    %157 = arith.mulf %156, %155 : vector<1x256xf32>
    %158 = arith.addf %152, %157 : vector<1x256xf32>
    %c64_43 = arith.constant 64 : index
    %159 = memref.load %arg7[%c64_43] : memref<98xf32, #tpu.memory_space<smem>>
    %160 = vector.extract_strided_slice %153 {offsets = [1, 0], sizes = [1, 256], strides = [1, 1]} : vector<2x256xf32> to vector<1x256xf32>
    %161 = vector.broadcast %159 : f32 to vector<1x256xf32>
    %162 = arith.mulf %161, %160 : vector<1x256xf32>
    %163 = arith.addf %158, %162 : vector<1x256xf32>
    %c0_44 = arith.constant 0 : index
    %c49_45 = arith.constant 49 : index
    %164 = vector.load %arg10[%c0_44, %c49_45] : memref<2x358xf32, #tpu.memory_space<vmem>>, vector<2x256xf32>
    %c22 = arith.constant 22 : index
    %165 = memref.load %arg7[%c22] : memref<98xf32, #tpu.memory_space<smem>>
    %166 = vector.extract_strided_slice %164 {offsets = [0, 0], sizes = [1, 256], strides = [1, 1]} : vector<2x256xf32> to vector<1x256xf32>
    %167 = vector.broadcast %165 : f32 to vector<1x256xf32>
    %168 = arith.mulf %167, %166 : vector<1x256xf32>
    %169 = arith.addf %163, %168 : vector<1x256xf32>
    %c71 = arith.constant 71 : index
    %170 = memref.load %arg7[%c71] : memref<98xf32, #tpu.memory_space<smem>>
    %171 = vector.extract_strided_slice %164 {offsets = [1, 0], sizes = [1, 256], strides = [1, 1]} : vector<2x256xf32> to vector<1x256xf32>
    %172 = vector.broadcast %170 : f32 to vector<1x256xf32>
    %173 = arith.mulf %172, %171 : vector<1x256xf32>
    %174 = arith.addf %169, %173 : vector<1x256xf32>
    %c0_46 = arith.constant 0 : index
    %c65 = arith.constant 65 : index
    %175 = vector.load %arg10[%c0_46, %c65] : memref<2x358xf32, #tpu.memory_space<vmem>>, vector<2x256xf32>
    %c29 = arith.constant 29 : index
    %176 = memref.load %arg7[%c29] : memref<98xf32, #tpu.memory_space<smem>>
    %177 = vector.extract_strided_slice %175 {offsets = [0, 0], sizes = [1, 256], strides = [1, 1]} : vector<2x256xf32> to vector<1x256xf32>
    %178 = vector.broadcast %176 : f32 to vector<1x256xf32>
    %179 = arith.mulf %178, %177 : vector<1x256xf32>
    %180 = arith.addf %174, %179 : vector<1x256xf32>
    %c78 = arith.constant 78 : index
    %181 = memref.load %arg7[%c78] : memref<98xf32, #tpu.memory_space<smem>>
    %182 = vector.extract_strided_slice %175 {offsets = [1, 0], sizes = [1, 256], strides = [1, 1]} : vector<2x256xf32> to vector<1x256xf32>
    %183 = vector.broadcast %181 : f32 to vector<1x256xf32>
    %184 = arith.mulf %183, %182 : vector<1x256xf32>
    %185 = arith.addf %180, %184 : vector<1x256xf32>
    %c0_47 = arith.constant 0 : index
    %c81 = arith.constant 81 : index
    %186 = vector.load %arg10[%c0_47, %c81] : memref<2x358xf32, #tpu.memory_space<vmem>>, vector<2x256xf32>
    %c36 = arith.constant 36 : index
    %187 = memref.load %arg7[%c36] : memref<98xf32, #tpu.memory_space<smem>>
    %188 = vector.extract_strided_slice %186 {offsets = [0, 0], sizes = [1, 256], strides = [1, 1]} : vector<2x256xf32> to vector<1x256xf32>
    %189 = vector.broadcast %187 : f32 to vector<1x256xf32>
    %190 = arith.mulf %189, %188 : vector<1x256xf32>
    %191 = arith.addf %185, %190 : vector<1x256xf32>
    %c85 = arith.constant 85 : index
    %192 = memref.load %arg7[%c85] : memref<98xf32, #tpu.memory_space<smem>>
    %193 = vector.extract_strided_slice %186 {offsets = [1, 0], sizes = [1, 256], strides = [1, 1]} : vector<2x256xf32> to vector<1x256xf32>
    %194 = vector.broadcast %192 : f32 to vector<1x256xf32>
    %195 = arith.mulf %194, %193 : vector<1x256xf32>
    %196 = arith.addf %191, %195 : vector<1x256xf32>
    %c0_48 = arith.constant 0 : index
    %c97 = arith.constant 97 : index
    %197 = vector.load %arg10[%c0_48, %c97] : memref<2x358xf32, #tpu.memory_space<vmem>>, vector<2x256xf32>
    %c43 = arith.constant 43 : index
    %198 = memref.load %arg7[%c43] : memref<98xf32, #tpu.memory_space<smem>>
    %199 = vector.extract_strided_slice %197 {offsets = [0, 0], sizes = [1, 256], strides = [1, 1]} : vector<2x256xf32> to vector<1x256xf32>
    %200 = vector.broadcast %198 : f32 to vector<1x256xf32>
    %201 = arith.mulf %200, %199 : vector<1x256xf32>
    %202 = arith.addf %196, %201 : vector<1x256xf32>
    %c92 = arith.constant 92 : index
    %203 = memref.load %arg7[%c92] : memref<98xf32, #tpu.memory_space<smem>>
    %204 = vector.extract_strided_slice %197 {offsets = [1, 0], sizes = [1, 256], strides = [1, 1]} : vector<2x256xf32> to vector<1x256xf32>
    %205 = vector.broadcast %203 : f32 to vector<1x256xf32>
    %206 = arith.mulf %205, %204 : vector<1x256xf32>
    %207 = arith.addf %202, %206 : vector<1x256xf32>
    %c1_49 = arith.constant 1 : index
    %c0_50 = arith.constant 0 : index
    %208 = vector.load %arg6[%c1_49, %c0_50] : memref<7x256xf32, #tpu.memory_space<vmem>>, vector<1x256xf32>
    %209 = arith.mulf %207, %208 : vector<1x256xf32>
    %210 = arith.addf %129, %209 : vector<1x256xf32>
    %cst_51 = arith.constant 0.000000e+00 : f32
    %211 = vector.broadcast %cst_51 : f32 to vector<1x256xf32>
    %c0_52 = arith.constant 0 : index
    %c2 = arith.constant 2 : index
    %212 = vector.load %arg10[%c0_52, %c2] : memref<2x358xf32, #tpu.memory_space<vmem>>, vector<2x256xf32>
    %c2_53 = arith.constant 2 : index
    %213 = memref.load %arg7[%c2_53] : memref<98xf32, #tpu.memory_space<smem>>
    %214 = vector.extract_strided_slice %212 {offsets = [0, 0], sizes = [1, 256], strides = [1, 1]} : vector<2x256xf32> to vector<1x256xf32>
    %215 = vector.broadcast %213 : f32 to vector<1x256xf32>
    %216 = arith.mulf %215, %214 : vector<1x256xf32>
    %217 = arith.addf %211, %216 : vector<1x256xf32>
    %c51_54 = arith.constant 51 : index
    %218 = memref.load %arg7[%c51_54] : memref<98xf32, #tpu.memory_space<smem>>
    %219 = vector.extract_strided_slice %212 {offsets = [1, 0], sizes = [1, 256], strides = [1, 1]} : vector<2x256xf32> to vector<1x256xf32>
    %220 = vector.broadcast %218 : f32 to vector<1x256xf32>
    %221 = arith.mulf %220, %219 : vector<1x256xf32>
    %222 = arith.addf %217, %221 : vector<1x256xf32>
    %c0_55 = arith.constant 0 : index
    %c18 = arith.constant 18 : index
    %223 = vector.load %arg10[%c0_55, %c18] : memref<2x358xf32, #tpu.memory_space<vmem>>, vector<2x256xf32>
    %c9 = arith.constant 9 : index
    %224 = memref.load %arg7[%c9] : memref<98xf32, #tpu.memory_space<smem>>
    %225 = vector.extract_strided_slice %223 {offsets = [0, 0], sizes = [1, 256], strides = [1, 1]} : vector<2x256xf32> to vector<1x256xf32>
    %226 = vector.broadcast %224 : f32 to vector<1x256xf32>
    %227 = arith.mulf %226, %225 : vector<1x256xf32>
    %228 = arith.addf %222, %227 : vector<1x256xf32>
    %c58 = arith.constant 58 : index
    %229 = memref.load %arg7[%c58] : memref<98xf32, #tpu.memory_space<smem>>
    %230 = vector.extract_strided_slice %223 {offsets = [1, 0], sizes = [1, 256], strides = [1, 1]} : vector<2x256xf32> to vector<1x256xf32>
    %231 = vector.broadcast %229 : f32 to vector<1x256xf32>
    %232 = arith.mulf %231, %230 : vector<1x256xf32>
    %233 = arith.addf %228, %232 : vector<1x256xf32>
    %c0_56 = arith.constant 0 : index
    %c34 = arith.constant 34 : index
    %234 = vector.load %arg10[%c0_56, %c34] : memref<2x358xf32, #tpu.memory_space<vmem>>, vector<2x256xf32>
    %c16_57 = arith.constant 16 : index
    %235 = memref.load %arg7[%c16_57] : memref<98xf32, #tpu.memory_space<smem>>
    %236 = vector.extract_strided_slice %234 {offsets = [0, 0], sizes = [1, 256], strides = [1, 1]} : vector<2x256xf32> to vector<1x256xf32>
    %237 = vector.broadcast %235 : f32 to vector<1x256xf32>
    %238 = arith.mulf %237, %236 : vector<1x256xf32>
    %239 = arith.addf %233, %238 : vector<1x256xf32>
    %c65_58 = arith.constant 65 : index
    %240 = memref.load %arg7[%c65_58] : memref<98xf32, #tpu.memory_space<smem>>
    %241 = vector.extract_strided_slice %234 {offsets = [1, 0], sizes = [1, 256], strides = [1, 1]} : vector<2x256xf32> to vector<1x256xf32>
    %242 = vector.broadcast %240 : f32 to vector<1x256xf32>
    %243 = arith.mulf %242, %241 : vector<1x256xf32>
    %244 = arith.addf %239, %243 : vector<1x256xf32>
    %c0_59 = arith.constant 0 : index
    %c50_60 = arith.constant 50 : index
    %245 = vector.load %arg10[%c0_59, %c50_60] : memref<2x358xf32, #tpu.memory_space<vmem>>, vector<2x256xf32>
    %c23 = arith.constant 23 : index
    %246 = memref.load %arg7[%c23] : memref<98xf32, #tpu.memory_space<smem>>
    %247 = vector.extract_strided_slice %245 {offsets = [0, 0], sizes = [1, 256], strides = [1, 1]} : vector<2x256xf32> to vector<1x256xf32>
    %248 = vector.broadcast %246 : f32 to vector<1x256xf32>
    %249 = arith.mulf %248, %247 : vector<1x256xf32>
    %250 = arith.addf %244, %249 : vector<1x256xf32>
    %c72 = arith.constant 72 : index
    %251 = memref.load %arg7[%c72] : memref<98xf32, #tpu.memory_space<smem>>
    %252 = vector.extract_strided_slice %245 {offsets = [1, 0], sizes = [1, 256], strides = [1, 1]} : vector<2x256xf32> to vector<1x256xf32>
    %253 = vector.broadcast %251 : f32 to vector<1x256xf32>
    %254 = arith.mulf %253, %252 : vector<1x256xf32>
    %255 = arith.addf %250, %254 : vector<1x256xf32>
    %c0_61 = arith.constant 0 : index
    %c66 = arith.constant 66 : index
    %256 = vector.load %arg10[%c0_61, %c66] : memref<2x358xf32, #tpu.memory_space<vmem>>, vector<2x256xf32>
    %c30 = arith.constant 30 : index
    %257 = memref.load %arg7[%c30] : memref<98xf32, #tpu.memory_space<smem>>
    %258 = vector.extract_strided_slice %256 {offsets = [0, 0], sizes = [1, 256], strides = [1, 1]} : vector<2x256xf32> to vector<1x256xf32>
    %259 = vector.broadcast %257 : f32 to vector<1x256xf32>
    %260 = arith.mulf %259, %258 : vector<1x256xf32>
    %261 = arith.addf %255, %260 : vector<1x256xf32>
    %c79 = arith.constant 79 : index
    %262 = memref.load %arg7[%c79] : memref<98xf32, #tpu.memory_space<smem>>
    %263 = vector.extract_strided_slice %256 {offsets = [1, 0], sizes = [1, 256], strides = [1, 1]} : vector<2x256xf32> to vector<1x256xf32>
    %264 = vector.broadcast %262 : f32 to vector<1x256xf32>
    %265 = arith.mulf %264, %263 : vector<1x256xf32>
    %266 = arith.addf %261, %265 : vector<1x256xf32>
    %c0_62 = arith.constant 0 : index
    %c82 = arith.constant 82 : index
    %267 = vector.load %arg10[%c0_62, %c82] : memref<2x358xf32, #tpu.memory_space<vmem>>, vector<2x256xf32>
    %c37 = arith.constant 37 : index
    %268 = memref.load %arg7[%c37] : memref<98xf32, #tpu.memory_space<smem>>
    %269 = vector.extract_strided_slice %267 {offsets = [0, 0], sizes = [1, 256], strides = [1, 1]} : vector<2x256xf32> to vector<1x256xf32>
    %270 = vector.broadcast %268 : f32 to vector<1x256xf32>
    %271 = arith.mulf %270, %269 : vector<1x256xf32>
    %272 = arith.addf %266, %271 : vector<1x256xf32>
    %c86 = arith.constant 86 : index
    %273 = memref.load %arg7[%c86] : memref<98xf32, #tpu.memory_space<smem>>
    %274 = vector.extract_strided_slice %267 {offsets = [1, 0], sizes = [1, 256], strides = [1, 1]} : vector<2x256xf32> to vector<1x256xf32>
    %275 = vector.broadcast %273 : f32 to vector<1x256xf32>
    %276 = arith.mulf %275, %274 : vector<1x256xf32>
    %277 = arith.addf %272, %276 : vector<1x256xf32>
    %c0_63 = arith.constant 0 : index
    %c98 = arith.constant 98 : index
    %278 = vector.load %arg10[%c0_63, %c98] : memref<2x358xf32, #tpu.memory_space<vmem>>, vector<2x256xf32>
    %c44 = arith.constant 44 : index
    %279 = memref.load %arg7[%c44] : memref<98xf32, #tpu.memory_space<smem>>
    %280 = vector.extract_strided_slice %278 {offsets = [0, 0], sizes = [1, 256], strides = [1, 1]} : vector<2x256xf32> to vector<1x256xf32>
    %281 = vector.broadcast %279 : f32 to vector<1x256xf32>
    %282 = arith.mulf %281, %280 : vector<1x256xf32>
    %283 = arith.addf %277, %282 : vector<1x256xf32>
    %c93 = arith.constant 93 : index
    %284 = memref.load %arg7[%c93] : memref<98xf32, #tpu.memory_space<smem>>
    %285 = vector.extract_strided_slice %278 {offsets = [1, 0], sizes = [1, 256], strides = [1, 1]} : vector<2x256xf32> to vector<1x256xf32>
    %286 = vector.broadcast %284 : f32 to vector<1x256xf32>
    %287 = arith.mulf %286, %285 : vector<1x256xf32>
    %288 = arith.addf %283, %287 : vector<1x256xf32>
    %c2_64 = arith.constant 2 : index
    %c0_65 = arith.constant 0 : index
    %289 = vector.load %arg6[%c2_64, %c0_65] : memref<7x256xf32, #tpu.memory_space<vmem>>, vector<1x256xf32>
    %290 = arith.mulf %288, %289 : vector<1x256xf32>
    %291 = arith.addf %210, %290 : vector<1x256xf32>
    %cst_66 = arith.constant 0.000000e+00 : f32
    %292 = vector.broadcast %cst_66 : f32 to vector<1x256xf32>
    %c0_67 = arith.constant 0 : index
    %c3 = arith.constant 3 : index
    %293 = vector.load %arg10[%c0_67, %c3] : memref<2x358xf32, #tpu.memory_space<vmem>>, vector<2x256xf32>
    %c3_68 = arith.constant 3 : index
    %294 = memref.load %arg7[%c3_68] : memref<98xf32, #tpu.memory_space<smem>>
    %295 = vector.extract_strided_slice %293 {offsets = [0, 0], sizes = [1, 256], strides = [1, 1]} : vector<2x256xf32> to vector<1x256xf32>
    %296 = vector.broadcast %294 : f32 to vector<1x256xf32>
    %297 = arith.mulf %296, %295 : vector<1x256xf32>
    %298 = arith.addf %292, %297 : vector<1x256xf32>
    %c52 = arith.constant 52 : index
    %299 = memref.load %arg7[%c52] : memref<98xf32, #tpu.memory_space<smem>>
    %300 = vector.extract_strided_slice %293 {offsets = [1, 0], sizes = [1, 256], strides = [1, 1]} : vector<2x256xf32> to vector<1x256xf32>
    %301 = vector.broadcast %299 : f32 to vector<1x256xf32>
    %302 = arith.mulf %301, %300 : vector<1x256xf32>
    %303 = arith.addf %298, %302 : vector<1x256xf32>
    %c0_69 = arith.constant 0 : index
    %c19 = arith.constant 19 : index
    %304 = vector.load %arg10[%c0_69, %c19] : memref<2x358xf32, #tpu.memory_space<vmem>>, vector<2x256xf32>
    %c10 = arith.constant 10 : index
    %305 = memref.load %arg7[%c10] : memref<98xf32, #tpu.memory_space<smem>>
    %306 = vector.extract_strided_slice %304 {offsets = [0, 0], sizes = [1, 256], strides = [1, 1]} : vector<2x256xf32> to vector<1x256xf32>
    %307 = vector.broadcast %305 : f32 to vector<1x256xf32>
    %308 = arith.mulf %307, %306 : vector<1x256xf32>
    %309 = arith.addf %303, %308 : vector<1x256xf32>
    %c59 = arith.constant 59 : index
    %310 = memref.load %arg7[%c59] : memref<98xf32, #tpu.memory_space<smem>>
    %311 = vector.extract_strided_slice %304 {offsets = [1, 0], sizes = [1, 256], strides = [1, 1]} : vector<2x256xf32> to vector<1x256xf32>
    %312 = vector.broadcast %310 : f32 to vector<1x256xf32>
    %313 = arith.mulf %312, %311 : vector<1x256xf32>
    %314 = arith.addf %309, %313 : vector<1x256xf32>
    %c0_70 = arith.constant 0 : index
    %c35_71 = arith.constant 35 : index
    %315 = vector.load %arg10[%c0_70, %c35_71] : memref<2x358xf32, #tpu.memory_space<vmem>>, vector<2x256xf32>
    %c17_72 = arith.constant 17 : index
    %316 = memref.load %arg7[%c17_72] : memref<98xf32, #tpu.memory_space<smem>>
    %317 = vector.extract_strided_slice %315 {offsets = [0, 0], sizes = [1, 256], strides = [1, 1]} : vector<2x256xf32> to vector<1x256xf32>
    %318 = vector.broadcast %316 : f32 to vector<1x256xf32>
    %319 = arith.mulf %318, %317 : vector<1x256xf32>
    %320 = arith.addf %314, %319 : vector<1x256xf32>
    %c66_73 = arith.constant 66 : index
    %321 = memref.load %arg7[%c66_73] : memref<98xf32, #tpu.memory_space<smem>>
    %322 = vector.extract_strided_slice %315 {offsets = [1, 0], sizes = [1, 256], strides = [1, 1]} : vector<2x256xf32> to vector<1x256xf32>
    %323 = vector.broadcast %321 : f32 to vector<1x256xf32>
    %324 = arith.mulf %323, %322 : vector<1x256xf32>
    %325 = arith.addf %320, %324 : vector<1x256xf32>
    %c0_74 = arith.constant 0 : index
    %c51_75 = arith.constant 51 : index
    %326 = vector.load %arg10[%c0_74, %c51_75] : memref<2x358xf32, #tpu.memory_space<vmem>>, vector<2x256xf32>
    %c24 = arith.constant 24 : index
    %327 = memref.load %arg7[%c24] : memref<98xf32, #tpu.memory_space<smem>>
    %328 = vector.extract_strided_slice %326 {offsets = [0, 0], sizes = [1, 256], strides = [1, 1]} : vector<2x256xf32> to vector<1x256xf32>
    %329 = vector.broadcast %327 : f32 to vector<1x256xf32>
    %330 = arith.mulf %329, %328 : vector<1x256xf32>
    %331 = arith.addf %325, %330 : vector<1x256xf32>
    %c73 = arith.constant 73 : index
    %332 = memref.load %arg7[%c73] : memref<98xf32, #tpu.memory_space<smem>>
    %333 = vector.extract_strided_slice %326 {offsets = [1, 0], sizes = [1, 256], strides = [1, 1]} : vector<2x256xf32> to vector<1x256xf32>
    %334 = vector.broadcast %332 : f32 to vector<1x256xf32>
    %335 = arith.mulf %334, %333 : vector<1x256xf32>
    %336 = arith.addf %331, %335 : vector<1x256xf32>
    %c0_76 = arith.constant 0 : index
    %c67 = arith.constant 67 : index
    %337 = vector.load %arg10[%c0_76, %c67] : memref<2x358xf32, #tpu.memory_space<vmem>>, vector<2x256xf32>
    %c31 = arith.constant 31 : index
    %338 = memref.load %arg7[%c31] : memref<98xf32, #tpu.memory_space<smem>>
    %339 = vector.extract_strided_slice %337 {offsets = [0, 0], sizes = [1, 256], strides = [1, 1]} : vector<2x256xf32> to vector<1x256xf32>
    %340 = vector.broadcast %338 : f32 to vector<1x256xf32>
    %341 = arith.mulf %340, %339 : vector<1x256xf32>
    %342 = arith.addf %336, %341 : vector<1x256xf32>
    %c80_77 = arith.constant 80 : index
    %343 = memref.load %arg7[%c80_77] : memref<98xf32, #tpu.memory_space<smem>>
    %344 = vector.extract_strided_slice %337 {offsets = [1, 0], sizes = [1, 256], strides = [1, 1]} : vector<2x256xf32> to vector<1x256xf32>
    %345 = vector.broadcast %343 : f32 to vector<1x256xf32>
    %346 = arith.mulf %345, %344 : vector<1x256xf32>
    %347 = arith.addf %342, %346 : vector<1x256xf32>
    %c0_78 = arith.constant 0 : index
    %c83 = arith.constant 83 : index
    %348 = vector.load %arg10[%c0_78, %c83] : memref<2x358xf32, #tpu.memory_space<vmem>>, vector<2x256xf32>
    %c38 = arith.constant 38 : index
    %349 = memref.load %arg7[%c38] : memref<98xf32, #tpu.memory_space<smem>>
    %350 = vector.extract_strided_slice %348 {offsets = [0, 0], sizes = [1, 256], strides = [1, 1]} : vector<2x256xf32> to vector<1x256xf32>
    %351 = vector.broadcast %349 : f32 to vector<1x256xf32>
    %352 = arith.mulf %351, %350 : vector<1x256xf32>
    %353 = arith.addf %347, %352 : vector<1x256xf32>
    %c87 = arith.constant 87 : index
    %354 = memref.load %arg7[%c87] : memref<98xf32, #tpu.memory_space<smem>>
    %355 = vector.extract_strided_slice %348 {offsets = [1, 0], sizes = [1, 256], strides = [1, 1]} : vector<2x256xf32> to vector<1x256xf32>
    %356 = vector.broadcast %354 : f32 to vector<1x256xf32>
    %357 = arith.mulf %356, %355 : vector<1x256xf32>
    %358 = arith.addf %353, %357 : vector<1x256xf32>
    %c0_79 = arith.constant 0 : index
    %c99 = arith.constant 99 : index
    %359 = vector.load %arg10[%c0_79, %c99] : memref<2x358xf32, #tpu.memory_space<vmem>>, vector<2x256xf32>
    %c45 = arith.constant 45 : index
    %360 = memref.load %arg7[%c45] : memref<98xf32, #tpu.memory_space<smem>>
    %361 = vector.extract_strided_slice %359 {offsets = [0, 0], sizes = [1, 256], strides = [1, 1]} : vector<2x256xf32> to vector<1x256xf32>
    %362 = vector.broadcast %360 : f32 to vector<1x256xf32>
    %363 = arith.mulf %362, %361 : vector<1x256xf32>
    %364 = arith.addf %358, %363 : vector<1x256xf32>
    %c94 = arith.constant 94 : index
    %365 = memref.load %arg7[%c94] : memref<98xf32, #tpu.memory_space<smem>>
    %366 = vector.extract_strided_slice %359 {offsets = [1, 0], sizes = [1, 256], strides = [1, 1]} : vector<2x256xf32> to vector<1x256xf32>
    %367 = vector.broadcast %365 : f32 to vector<1x256xf32>
    %368 = arith.mulf %367, %366 : vector<1x256xf32>
    %369 = arith.addf %364, %368 : vector<1x256xf32>
    %c3_80 = arith.constant 3 : index
    %c0_81 = arith.constant 0 : index
    %370 = vector.load %arg6[%c3_80, %c0_81] : memref<7x256xf32, #tpu.memory_space<vmem>>, vector<1x256xf32>
    %371 = arith.mulf %369, %370 : vector<1x256xf32>
    %372 = arith.addf %291, %371 : vector<1x256xf32>
    %cst_82 = arith.constant 0.000000e+00 : f32
    %373 = vector.broadcast %cst_82 : f32 to vector<1x256xf32>
    %c0_83 = arith.constant 0 : index
    %c4 = arith.constant 4 : index
    %374 = vector.load %arg10[%c0_83, %c4] : memref<2x358xf32, #tpu.memory_space<vmem>>, vector<2x256xf32>
    %c4_84 = arith.constant 4 : index
    %375 = memref.load %arg7[%c4_84] : memref<98xf32, #tpu.memory_space<smem>>
    %376 = vector.extract_strided_slice %374 {offsets = [0, 0], sizes = [1, 256], strides = [1, 1]} : vector<2x256xf32> to vector<1x256xf32>
    %377 = vector.broadcast %375 : f32 to vector<1x256xf32>
    %378 = arith.mulf %377, %376 : vector<1x256xf32>
    %379 = arith.addf %373, %378 : vector<1x256xf32>
    %c53 = arith.constant 53 : index
    %380 = memref.load %arg7[%c53] : memref<98xf32, #tpu.memory_space<smem>>
    %381 = vector.extract_strided_slice %374 {offsets = [1, 0], sizes = [1, 256], strides = [1, 1]} : vector<2x256xf32> to vector<1x256xf32>
    %382 = vector.broadcast %380 : f32 to vector<1x256xf32>
    %383 = arith.mulf %382, %381 : vector<1x256xf32>
    %384 = arith.addf %379, %383 : vector<1x256xf32>
    %c0_85 = arith.constant 0 : index
    %c20 = arith.constant 20 : index
    %385 = vector.load %arg10[%c0_85, %c20] : memref<2x358xf32, #tpu.memory_space<vmem>>, vector<2x256xf32>
    %c11 = arith.constant 11 : index
    %386 = memref.load %arg7[%c11] : memref<98xf32, #tpu.memory_space<smem>>
    %387 = vector.extract_strided_slice %385 {offsets = [0, 0], sizes = [1, 256], strides = [1, 1]} : vector<2x256xf32> to vector<1x256xf32>
    %388 = vector.broadcast %386 : f32 to vector<1x256xf32>
    %389 = arith.mulf %388, %387 : vector<1x256xf32>
    %390 = arith.addf %384, %389 : vector<1x256xf32>
    %c60 = arith.constant 60 : index
    %391 = memref.load %arg7[%c60] : memref<98xf32, #tpu.memory_space<smem>>
    %392 = vector.extract_strided_slice %385 {offsets = [1, 0], sizes = [1, 256], strides = [1, 1]} : vector<2x256xf32> to vector<1x256xf32>
    %393 = vector.broadcast %391 : f32 to vector<1x256xf32>
    %394 = arith.mulf %393, %392 : vector<1x256xf32>
    %395 = arith.addf %390, %394 : vector<1x256xf32>
    %c0_86 = arith.constant 0 : index
    %c36_87 = arith.constant 36 : index
    %396 = vector.load %arg10[%c0_86, %c36_87] : memref<2x358xf32, #tpu.memory_space<vmem>>, vector<2x256xf32>
    %c18_88 = arith.constant 18 : index
    %397 = memref.load %arg7[%c18_88] : memref<98xf32, #tpu.memory_space<smem>>
    %398 = vector.extract_strided_slice %396 {offsets = [0, 0], sizes = [1, 256], strides = [1, 1]} : vector<2x256xf32> to vector<1x256xf32>
    %399 = vector.broadcast %397 : f32 to vector<1x256xf32>
    %400 = arith.mulf %399, %398 : vector<1x256xf32>
    %401 = arith.addf %395, %400 : vector<1x256xf32>
    %c67_89 = arith.constant 67 : index
    %402 = memref.load %arg7[%c67_89] : memref<98xf32, #tpu.memory_space<smem>>
    %403 = vector.extract_strided_slice %396 {offsets = [1, 0], sizes = [1, 256], strides = [1, 1]} : vector<2x256xf32> to vector<1x256xf32>
    %404 = vector.broadcast %402 : f32 to vector<1x256xf32>
    %405 = arith.mulf %404, %403 : vector<1x256xf32>
    %406 = arith.addf %401, %405 : vector<1x256xf32>
    %c0_90 = arith.constant 0 : index
    %c52_91 = arith.constant 52 : index
    %407 = vector.load %arg10[%c0_90, %c52_91] : memref<2x358xf32, #tpu.memory_space<vmem>>, vector<2x256xf32>
    %c25 = arith.constant 25 : index
    %408 = memref.load %arg7[%c25] : memref<98xf32, #tpu.memory_space<smem>>
    %409 = vector.extract_strided_slice %407 {offsets = [0, 0], sizes = [1, 256], strides = [1, 1]} : vector<2x256xf32> to vector<1x256xf32>
    %410 = vector.broadcast %408 : f32 to vector<1x256xf32>
    %411 = arith.mulf %410, %409 : vector<1x256xf32>
    %412 = arith.addf %406, %411 : vector<1x256xf32>
    %c74 = arith.constant 74 : index
    %413 = memref.load %arg7[%c74] : memref<98xf32, #tpu.memory_space<smem>>
    %414 = vector.extract_strided_slice %407 {offsets = [1, 0], sizes = [1, 256], strides = [1, 1]} : vector<2x256xf32> to vector<1x256xf32>
    %415 = vector.broadcast %413 : f32 to vector<1x256xf32>
    %416 = arith.mulf %415, %414 : vector<1x256xf32>
    %417 = arith.addf %412, %416 : vector<1x256xf32>
    %c0_92 = arith.constant 0 : index
    %c68 = arith.constant 68 : index
    %418 = vector.load %arg10[%c0_92, %c68] : memref<2x358xf32, #tpu.memory_space<vmem>>, vector<2x256xf32>
    %c32_93 = arith.constant 32 : index
    %419 = memref.load %arg7[%c32_93] : memref<98xf32, #tpu.memory_space<smem>>
    %420 = vector.extract_strided_slice %418 {offsets = [0, 0], sizes = [1, 256], strides = [1, 1]} : vector<2x256xf32> to vector<1x256xf32>
    %421 = vector.broadcast %419 : f32 to vector<1x256xf32>
    %422 = arith.mulf %421, %420 : vector<1x256xf32>
    %423 = arith.addf %417, %422 : vector<1x256xf32>
    %c81_94 = arith.constant 81 : index
    %424 = memref.load %arg7[%c81_94] : memref<98xf32, #tpu.memory_space<smem>>
    %425 = vector.extract_strided_slice %418 {offsets = [1, 0], sizes = [1, 256], strides = [1, 1]} : vector<2x256xf32> to vector<1x256xf32>
    %426 = vector.broadcast %424 : f32 to vector<1x256xf32>
    %427 = arith.mulf %426, %425 : vector<1x256xf32>
    %428 = arith.addf %423, %427 : vector<1x256xf32>
    %c0_95 = arith.constant 0 : index
    %c84_96 = arith.constant 84 : index
    %429 = vector.load %arg10[%c0_95, %c84_96] : memref<2x358xf32, #tpu.memory_space<vmem>>, vector<2x256xf32>
    %c39 = arith.constant 39 : index
    %430 = memref.load %arg7[%c39] : memref<98xf32, #tpu.memory_space<smem>>
    %431 = vector.extract_strided_slice %429 {offsets = [0, 0], sizes = [1, 256], strides = [1, 1]} : vector<2x256xf32> to vector<1x256xf32>
    %432 = vector.broadcast %430 : f32 to vector<1x256xf32>
    %433 = arith.mulf %432, %431 : vector<1x256xf32>
    %434 = arith.addf %428, %433 : vector<1x256xf32>
    %c88 = arith.constant 88 : index
    %435 = memref.load %arg7[%c88] : memref<98xf32, #tpu.memory_space<smem>>
    %436 = vector.extract_strided_slice %429 {offsets = [1, 0], sizes = [1, 256], strides = [1, 1]} : vector<2x256xf32> to vector<1x256xf32>
    %437 = vector.broadcast %435 : f32 to vector<1x256xf32>
    %438 = arith.mulf %437, %436 : vector<1x256xf32>
    %439 = arith.addf %434, %438 : vector<1x256xf32>
    %c0_97 = arith.constant 0 : index
    %c100 = arith.constant 100 : index
    %440 = vector.load %arg10[%c0_97, %c100] : memref<2x358xf32, #tpu.memory_space<vmem>>, vector<2x256xf32>
    %c46 = arith.constant 46 : index
    %441 = memref.load %arg7[%c46] : memref<98xf32, #tpu.memory_space<smem>>
    %442 = vector.extract_strided_slice %440 {offsets = [0, 0], sizes = [1, 256], strides = [1, 1]} : vector<2x256xf32> to vector<1x256xf32>
    %443 = vector.broadcast %441 : f32 to vector<1x256xf32>
    %444 = arith.mulf %443, %442 : vector<1x256xf32>
    %445 = arith.addf %439, %444 : vector<1x256xf32>
    %c95 = arith.constant 95 : index
    %446 = memref.load %arg7[%c95] : memref<98xf32, #tpu.memory_space<smem>>
    %447 = vector.extract_strided_slice %440 {offsets = [1, 0], sizes = [1, 256], strides = [1, 1]} : vector<2x256xf32> to vector<1x256xf32>
    %448 = vector.broadcast %446 : f32 to vector<1x256xf32>
    %449 = arith.mulf %448, %447 : vector<1x256xf32>
    %450 = arith.addf %445, %449 : vector<1x256xf32>
    %c4_98 = arith.constant 4 : index
    %c0_99 = arith.constant 0 : index
    %451 = vector.load %arg6[%c4_98, %c0_99] : memref<7x256xf32, #tpu.memory_space<vmem>>, vector<1x256xf32>
    %452 = arith.mulf %450, %451 : vector<1x256xf32>
    %453 = arith.addf %372, %452 : vector<1x256xf32>
    %cst_100 = arith.constant 0.000000e+00 : f32
    %454 = vector.broadcast %cst_100 : f32 to vector<1x256xf32>
    %c0_101 = arith.constant 0 : index
    %c5 = arith.constant 5 : index
    %455 = vector.load %arg10[%c0_101, %c5] : memref<2x358xf32, #tpu.memory_space<vmem>>, vector<2x256xf32>
    %c5_102 = arith.constant 5 : index
    %456 = memref.load %arg7[%c5_102] : memref<98xf32, #tpu.memory_space<smem>>
    %457 = vector.extract_strided_slice %455 {offsets = [0, 0], sizes = [1, 256], strides = [1, 1]} : vector<2x256xf32> to vector<1x256xf32>
    %458 = vector.broadcast %456 : f32 to vector<1x256xf32>
    %459 = arith.mulf %458, %457 : vector<1x256xf32>
    %460 = arith.addf %454, %459 : vector<1x256xf32>
    %c54 = arith.constant 54 : index
    %461 = memref.load %arg7[%c54] : memref<98xf32, #tpu.memory_space<smem>>
    %462 = vector.extract_strided_slice %455 {offsets = [1, 0], sizes = [1, 256], strides = [1, 1]} : vector<2x256xf32> to vector<1x256xf32>
    %463 = vector.broadcast %461 : f32 to vector<1x256xf32>
    %464 = arith.mulf %463, %462 : vector<1x256xf32>
    %465 = arith.addf %460, %464 : vector<1x256xf32>
    %c0_103 = arith.constant 0 : index
    %c21_104 = arith.constant 21 : index
    %466 = vector.load %arg10[%c0_103, %c21_104] : memref<2x358xf32, #tpu.memory_space<vmem>>, vector<2x256xf32>
    %c12 = arith.constant 12 : index
    %467 = memref.load %arg7[%c12] : memref<98xf32, #tpu.memory_space<smem>>
    %468 = vector.extract_strided_slice %466 {offsets = [0, 0], sizes = [1, 256], strides = [1, 1]} : vector<2x256xf32> to vector<1x256xf32>
    %469 = vector.broadcast %467 : f32 to vector<1x256xf32>
    %470 = arith.mulf %469, %468 : vector<1x256xf32>
    %471 = arith.addf %465, %470 : vector<1x256xf32>
    %c61 = arith.constant 61 : index
    %472 = memref.load %arg7[%c61] : memref<98xf32, #tpu.memory_space<smem>>
    %473 = vector.extract_strided_slice %466 {offsets = [1, 0], sizes = [1, 256], strides = [1, 1]} : vector<2x256xf32> to vector<1x256xf32>
    %474 = vector.broadcast %472 : f32 to vector<1x256xf32>
    %475 = arith.mulf %474, %473 : vector<1x256xf32>
    %476 = arith.addf %471, %475 : vector<1x256xf32>
    %c0_105 = arith.constant 0 : index
    %c37_106 = arith.constant 37 : index
    %477 = vector.load %arg10[%c0_105, %c37_106] : memref<2x358xf32, #tpu.memory_space<vmem>>, vector<2x256xf32>
    %c19_107 = arith.constant 19 : index
    %478 = memref.load %arg7[%c19_107] : memref<98xf32, #tpu.memory_space<smem>>
    %479 = vector.extract_strided_slice %477 {offsets = [0, 0], sizes = [1, 256], strides = [1, 1]} : vector<2x256xf32> to vector<1x256xf32>
    %480 = vector.broadcast %478 : f32 to vector<1x256xf32>
    %481 = arith.mulf %480, %479 : vector<1x256xf32>
    %482 = arith.addf %476, %481 : vector<1x256xf32>
    %c68_108 = arith.constant 68 : index
    %483 = memref.load %arg7[%c68_108] : memref<98xf32, #tpu.memory_space<smem>>
    %484 = vector.extract_strided_slice %477 {offsets = [1, 0], sizes = [1, 256], strides = [1, 1]} : vector<2x256xf32> to vector<1x256xf32>
    %485 = vector.broadcast %483 : f32 to vector<1x256xf32>
    %486 = arith.mulf %485, %484 : vector<1x256xf32>
    %487 = arith.addf %482, %486 : vector<1x256xf32>
    %c0_109 = arith.constant 0 : index
    %c53_110 = arith.constant 53 : index
    %488 = vector.load %arg10[%c0_109, %c53_110] : memref<2x358xf32, #tpu.memory_space<vmem>>, vector<2x256xf32>
    %c26 = arith.constant 26 : index
    %489 = memref.load %arg7[%c26] : memref<98xf32, #tpu.memory_space<smem>>
    %490 = vector.extract_strided_slice %488 {offsets = [0, 0], sizes = [1, 256], strides = [1, 1]} : vector<2x256xf32> to vector<1x256xf32>
    %491 = vector.broadcast %489 : f32 to vector<1x256xf32>
    %492 = arith.mulf %491, %490 : vector<1x256xf32>
    %493 = arith.addf %487, %492 : vector<1x256xf32>
    %c75 = arith.constant 75 : index
    %494 = memref.load %arg7[%c75] : memref<98xf32, #tpu.memory_space<smem>>
    %495 = vector.extract_strided_slice %488 {offsets = [1, 0], sizes = [1, 256], strides = [1, 1]} : vector<2x256xf32> to vector<1x256xf32>
    %496 = vector.broadcast %494 : f32 to vector<1x256xf32>
    %497 = arith.mulf %496, %495 : vector<1x256xf32>
    %498 = arith.addf %493, %497 : vector<1x256xf32>
    %c0_111 = arith.constant 0 : index
    %c69 = arith.constant 69 : index
    %499 = vector.load %arg10[%c0_111, %c69] : memref<2x358xf32, #tpu.memory_space<vmem>>, vector<2x256xf32>
    %c33_112 = arith.constant 33 : index
    %500 = memref.load %arg7[%c33_112] : memref<98xf32, #tpu.memory_space<smem>>
    %501 = vector.extract_strided_slice %499 {offsets = [0, 0], sizes = [1, 256], strides = [1, 1]} : vector<2x256xf32> to vector<1x256xf32>
    %502 = vector.broadcast %500 : f32 to vector<1x256xf32>
    %503 = arith.mulf %502, %501 : vector<1x256xf32>
    %504 = arith.addf %498, %503 : vector<1x256xf32>
    %c82_113 = arith.constant 82 : index
    %505 = memref.load %arg7[%c82_113] : memref<98xf32, #tpu.memory_space<smem>>
    %506 = vector.extract_strided_slice %499 {offsets = [1, 0], sizes = [1, 256], strides = [1, 1]} : vector<2x256xf32> to vector<1x256xf32>
    %507 = vector.broadcast %505 : f32 to vector<1x256xf32>
    %508 = arith.mulf %507, %506 : vector<1x256xf32>
    %509 = arith.addf %504, %508 : vector<1x256xf32>
    %c0_114 = arith.constant 0 : index
    %c85_115 = arith.constant 85 : index
    %510 = vector.load %arg10[%c0_114, %c85_115] : memref<2x358xf32, #tpu.memory_space<vmem>>, vector<2x256xf32>
    %c40 = arith.constant 40 : index
    %511 = memref.load %arg7[%c40] : memref<98xf32, #tpu.memory_space<smem>>
    %512 = vector.extract_strided_slice %510 {offsets = [0, 0], sizes = [1, 256], strides = [1, 1]} : vector<2x256xf32> to vector<1x256xf32>
    %513 = vector.broadcast %511 : f32 to vector<1x256xf32>
    %514 = arith.mulf %513, %512 : vector<1x256xf32>
    %515 = arith.addf %509, %514 : vector<1x256xf32>
    %c89 = arith.constant 89 : index
    %516 = memref.load %arg7[%c89] : memref<98xf32, #tpu.memory_space<smem>>
    %517 = vector.extract_strided_slice %510 {offsets = [1, 0], sizes = [1, 256], strides = [1, 1]} : vector<2x256xf32> to vector<1x256xf32>
    %518 = vector.broadcast %516 : f32 to vector<1x256xf32>
    %519 = arith.mulf %518, %517 : vector<1x256xf32>
    %520 = arith.addf %515, %519 : vector<1x256xf32>
    %c0_116 = arith.constant 0 : index
    %c101 = arith.constant 101 : index
    %521 = vector.load %arg10[%c0_116, %c101] : memref<2x358xf32, #tpu.memory_space<vmem>>, vector<2x256xf32>
    %c47 = arith.constant 47 : index
    %522 = memref.load %arg7[%c47] : memref<98xf32, #tpu.memory_space<smem>>
    %523 = vector.extract_strided_slice %521 {offsets = [0, 0], sizes = [1, 256], strides = [1, 1]} : vector<2x256xf32> to vector<1x256xf32>
    %524 = vector.broadcast %522 : f32 to vector<1x256xf32>
    %525 = arith.mulf %524, %523 : vector<1x256xf32>
    %526 = arith.addf %520, %525 : vector<1x256xf32>
    %c96_117 = arith.constant 96 : index
    %527 = memref.load %arg7[%c96_117] : memref<98xf32, #tpu.memory_space<smem>>
    %528 = vector.extract_strided_slice %521 {offsets = [1, 0], sizes = [1, 256], strides = [1, 1]} : vector<2x256xf32> to vector<1x256xf32>
    %529 = vector.broadcast %527 : f32 to vector<1x256xf32>
    %530 = arith.mulf %529, %528 : vector<1x256xf32>
    %531 = arith.addf %526, %530 : vector<1x256xf32>
    %c5_118 = arith.constant 5 : index
    %c0_119 = arith.constant 0 : index
    %532 = vector.load %arg6[%c5_118, %c0_119] : memref<7x256xf32, #tpu.memory_space<vmem>>, vector<1x256xf32>
    %533 = arith.mulf %531, %532 : vector<1x256xf32>
    %534 = arith.addf %453, %533 : vector<1x256xf32>
    %cst_120 = arith.constant 0.000000e+00 : f32
    %535 = vector.broadcast %cst_120 : f32 to vector<1x256xf32>
    %c0_121 = arith.constant 0 : index
    %c6 = arith.constant 6 : index
    %536 = vector.load %arg10[%c0_121, %c6] : memref<2x358xf32, #tpu.memory_space<vmem>>, vector<2x256xf32>
    %c6_122 = arith.constant 6 : index
    %537 = memref.load %arg7[%c6_122] : memref<98xf32, #tpu.memory_space<smem>>
    %538 = vector.extract_strided_slice %536 {offsets = [0, 0], sizes = [1, 256], strides = [1, 1]} : vector<2x256xf32> to vector<1x256xf32>
    %539 = vector.broadcast %537 : f32 to vector<1x256xf32>
    %540 = arith.mulf %539, %538 : vector<1x256xf32>
    %541 = arith.addf %535, %540 : vector<1x256xf32>
    %c55 = arith.constant 55 : index
    %542 = memref.load %arg7[%c55] : memref<98xf32, #tpu.memory_space<smem>>
    %543 = vector.extract_strided_slice %536 {offsets = [1, 0], sizes = [1, 256], strides = [1, 1]} : vector<2x256xf32> to vector<1x256xf32>
    %544 = vector.broadcast %542 : f32 to vector<1x256xf32>
    %545 = arith.mulf %544, %543 : vector<1x256xf32>
    %546 = arith.addf %541, %545 : vector<1x256xf32>
    %c0_123 = arith.constant 0 : index
    %c22_124 = arith.constant 22 : index
    %547 = vector.load %arg10[%c0_123, %c22_124] : memref<2x358xf32, #tpu.memory_space<vmem>>, vector<2x256xf32>
    %c13 = arith.constant 13 : index
    %548 = memref.load %arg7[%c13] : memref<98xf32, #tpu.memory_space<smem>>
    %549 = vector.extract_strided_slice %547 {offsets = [0, 0], sizes = [1, 256], strides = [1, 1]} : vector<2x256xf32> to vector<1x256xf32>
    %550 = vector.broadcast %548 : f32 to vector<1x256xf32>
    %551 = arith.mulf %550, %549 : vector<1x256xf32>
    %552 = arith.addf %546, %551 : vector<1x256xf32>
    %c62 = arith.constant 62 : index
    %553 = memref.load %arg7[%c62] : memref<98xf32, #tpu.memory_space<smem>>
    %554 = vector.extract_strided_slice %547 {offsets = [1, 0], sizes = [1, 256], strides = [1, 1]} : vector<2x256xf32> to vector<1x256xf32>
    %555 = vector.broadcast %553 : f32 to vector<1x256xf32>
    %556 = arith.mulf %555, %554 : vector<1x256xf32>
    %557 = arith.addf %552, %556 : vector<1x256xf32>
    %c0_125 = arith.constant 0 : index
    %c38_126 = arith.constant 38 : index
    %558 = vector.load %arg10[%c0_125, %c38_126] : memref<2x358xf32, #tpu.memory_space<vmem>>, vector<2x256xf32>
    %c20_127 = arith.constant 20 : index
    %559 = memref.load %arg7[%c20_127] : memref<98xf32, #tpu.memory_space<smem>>
    %560 = vector.extract_strided_slice %558 {offsets = [0, 0], sizes = [1, 256], strides = [1, 1]} : vector<2x256xf32> to vector<1x256xf32>
    %561 = vector.broadcast %559 : f32 to vector<1x256xf32>
    %562 = arith.mulf %561, %560 : vector<1x256xf32>
    %563 = arith.addf %557, %562 : vector<1x256xf32>
    %c69_128 = arith.constant 69 : index
    %564 = memref.load %arg7[%c69_128] : memref<98xf32, #tpu.memory_space<smem>>
    %565 = vector.extract_strided_slice %558 {offsets = [1, 0], sizes = [1, 256], strides = [1, 1]} : vector<2x256xf32> to vector<1x256xf32>
    %566 = vector.broadcast %564 : f32 to vector<1x256xf32>
    %567 = arith.mulf %566, %565 : vector<1x256xf32>
    %568 = arith.addf %563, %567 : vector<1x256xf32>
    %c0_129 = arith.constant 0 : index
    %c54_130 = arith.constant 54 : index
    %569 = vector.load %arg10[%c0_129, %c54_130] : memref<2x358xf32, #tpu.memory_space<vmem>>, vector<2x256xf32>
    %c27 = arith.constant 27 : index
    %570 = memref.load %arg7[%c27] : memref<98xf32, #tpu.memory_space<smem>>
    %571 = vector.extract_strided_slice %569 {offsets = [0, 0], sizes = [1, 256], strides = [1, 1]} : vector<2x256xf32> to vector<1x256xf32>
    %572 = vector.broadcast %570 : f32 to vector<1x256xf32>
    %573 = arith.mulf %572, %571 : vector<1x256xf32>
    %574 = arith.addf %568, %573 : vector<1x256xf32>
    %c76 = arith.constant 76 : index
    %575 = memref.load %arg7[%c76] : memref<98xf32, #tpu.memory_space<smem>>
    %576 = vector.extract_strided_slice %569 {offsets = [1, 0], sizes = [1, 256], strides = [1, 1]} : vector<2x256xf32> to vector<1x256xf32>
    %577 = vector.broadcast %575 : f32 to vector<1x256xf32>
    %578 = arith.mulf %577, %576 : vector<1x256xf32>
    %579 = arith.addf %574, %578 : vector<1x256xf32>
    %c0_131 = arith.constant 0 : index
    %c70_132 = arith.constant 70 : index
    %580 = vector.load %arg10[%c0_131, %c70_132] : memref<2x358xf32, #tpu.memory_space<vmem>>, vector<2x256xf32>
    %c34_133 = arith.constant 34 : index
    %581 = memref.load %arg7[%c34_133] : memref<98xf32, #tpu.memory_space<smem>>
    %582 = vector.extract_strided_slice %580 {offsets = [0, 0], sizes = [1, 256], strides = [1, 1]} : vector<2x256xf32> to vector<1x256xf32>
    %583 = vector.broadcast %581 : f32 to vector<1x256xf32>
    %584 = arith.mulf %583, %582 : vector<1x256xf32>
    %585 = arith.addf %579, %584 : vector<1x256xf32>
    %c83_134 = arith.constant 83 : index
    %586 = memref.load %arg7[%c83_134] : memref<98xf32, #tpu.memory_space<smem>>
    %587 = vector.extract_strided_slice %580 {offsets = [1, 0], sizes = [1, 256], strides = [1, 1]} : vector<2x256xf32> to vector<1x256xf32>
    %588 = vector.broadcast %586 : f32 to vector<1x256xf32>
    %589 = arith.mulf %588, %587 : vector<1x256xf32>
    %590 = arith.addf %585, %589 : vector<1x256xf32>
    %c0_135 = arith.constant 0 : index
    %c86_136 = arith.constant 86 : index
    %591 = vector.load %arg10[%c0_135, %c86_136] : memref<2x358xf32, #tpu.memory_space<vmem>>, vector<2x256xf32>
    %c41 = arith.constant 41 : index
    %592 = memref.load %arg7[%c41] : memref<98xf32, #tpu.memory_space<smem>>
    %593 = vector.extract_strided_slice %591 {offsets = [0, 0], sizes = [1, 256], strides = [1, 1]} : vector<2x256xf32> to vector<1x256xf32>
    %594 = vector.broadcast %592 : f32 to vector<1x256xf32>
    %595 = arith.mulf %594, %593 : vector<1x256xf32>
    %596 = arith.addf %590, %595 : vector<1x256xf32>
    %c90 = arith.constant 90 : index
    %597 = memref.load %arg7[%c90] : memref<98xf32, #tpu.memory_space<smem>>
    %598 = vector.extract_strided_slice %591 {offsets = [1, 0], sizes = [1, 256], strides = [1, 1]} : vector<2x256xf32> to vector<1x256xf32>
    %599 = vector.broadcast %597 : f32 to vector<1x256xf32>
    %600 = arith.mulf %599, %598 : vector<1x256xf32>
    %601 = arith.addf %596, %600 : vector<1x256xf32>
    %c0_137 = arith.constant 0 : index
    %c102 = arith.constant 102 : index
    %602 = vector.load %arg10[%c0_137, %c102] : memref<2x358xf32, #tpu.memory_space<vmem>>, vector<2x256xf32>
    %c48_138 = arith.constant 48 : index
    %603 = memref.load %arg7[%c48_138] : memref<98xf32, #tpu.memory_space<smem>>
    %604 = vector.extract_strided_slice %602 {offsets = [0, 0], sizes = [1, 256], strides = [1, 1]} : vector<2x256xf32> to vector<1x256xf32>
    %605 = vector.broadcast %603 : f32 to vector<1x256xf32>
    %606 = arith.mulf %605, %604 : vector<1x256xf32>
    %607 = arith.addf %601, %606 : vector<1x256xf32>
    %c97_139 = arith.constant 97 : index
    %608 = memref.load %arg7[%c97_139] : memref<98xf32, #tpu.memory_space<smem>>
    %609 = vector.extract_strided_slice %602 {offsets = [1, 0], sizes = [1, 256], strides = [1, 1]} : vector<2x256xf32> to vector<1x256xf32>
    %610 = vector.broadcast %608 : f32 to vector<1x256xf32>
    %611 = arith.mulf %610, %609 : vector<1x256xf32>
    %612 = arith.addf %607, %611 : vector<1x256xf32>
    %c6_140 = arith.constant 6 : index
    %c0_141 = arith.constant 0 : index
    %613 = vector.load %arg6[%c6_140, %c0_141] : memref<7x256xf32, #tpu.memory_space<vmem>>, vector<1x256xf32>
    %614 = arith.mulf %612, %613 : vector<1x256xf32>
    %615 = arith.addf %534, %614 : vector<1x256xf32>
    %c0_142 = arith.constant 0 : index
    %616 = memref.load %arg8[%c0_142] : memref<1xf32, #tpu.memory_space<smem>>
    %617 = vector.broadcast %616 : f32 to vector<1x256xf32>
    %618 = arith.addf %615, %617 : vector<1x256xf32>
    %619 = arith.negf %618 : vector<1x256xf32>
    %620 = math.exp %619 : vector<1x256xf32>
    %cst_143 = arith.constant 1.000000e+00 : f32
    %621 = vector.broadcast %cst_143 : f32 to vector<1x256xf32>
    %622 = arith.addf %621, %620 : vector<1x256xf32>
    %623 = arith.divf %621, %622 : vector<1x256xf32>
    %624 = vector.broadcast %623 : vector<1x256xf32> to vector<32x256xf32>
    %625 = arith.mulf %37, %624 : vector<32x256xf32>
    %c0_144 = arith.constant 0 : index
    %c0_145 = arith.constant 0 : index
    %c0_146 = arith.constant 0 : index
    %626 = vector.load %arg9[%c0_144, %c0_145, %c0_146] : memref<1x32x256xf32, #tpu.memory_space<vmem>>, vector<1x32x256xf32>
    %627 = vector.shape_cast %626 : vector<1x32x256xf32> to vector<32x256xf32>
    %628 = vector.shape_cast %625 : vector<32x256xf32> to vector<1x32x256xf32>
    tpu.vector_store %arg9[%c0_144, %c0_145, %c0_146], %628 {strides = array<i32>} : memref<1x32x256xf32, #tpu.memory_space<vmem>>, vector<1x32x256xf32>,
    return
  }
  func.func @transform_0(%arg0: i32) -> (i32, i32, i32) {
    %c0_i32 = arith.constant 0 : i32
    %c0_i32_0 = arith.constant 0 : i32
    %c0_i32_1 = arith.constant 0 : i32
    return %arg0, %c0_i32, %c0_i32_0 : i32, i32, i32
  }
  func.func @transform_1(%arg0: i32) -> (i32, i32) {
    %c0_i32 = arith.constant 0 : i32
    %c0_i32_0 = arith.constant 0 : i32
    %c0_i32_1 = arith.constant 0 : i32
    return %c0_i32, %c0_i32_0 : i32, i32
  }
  func.func @transform_2(%arg0: i32) -> (i32, i32) {
    %c0_i32 = arith.constant 0 : i32
    %c0_i32_0 = arith.constant 0 : i32
    %c0_i32_1 = arith.constant 0 : i32
    return %c0_i32, %c0_i32_0 : i32, i32
  }
  func.func @transform_3(%arg0: i32) -> (i32, i32) {
    %c0_i32 = arith.constant 0 : i32
    %c0_i32_0 = arith.constant 0 : i32
    %c0_i32_1 = arith.constant 0 : i32
    return %c0_i32, %c0_i32_0 : i32, i32
  }
  func.func @transform_4(%arg0: i32) -> (i32, i32) {
    %c0_i32 = arith.constant 0 : i32
    %c0_i32_0 = arith.constant 0 : i32
    %c0_i32_1 = arith.constant 0 : i32
    return %c0_i32, %c0_i32_0 : i32, i32
  }
  func.func @transform_5(%arg0: i32) -> (i32, i32) {
    %c0_i32 = arith.constant 0 : i32
    %c0_i32_0 = arith.constant 0 : i32
    %c0_i32_1 = arith.constant 0 : i32
    return %c0_i32, %c0_i32_0 : i32, i32
  }
  func.func @transform_6(%arg0: i32) -> i32 {
    %c0_i32 = arith.constant 0 : i32
    %c0_i32_0 = arith.constant 0 : i32
    return %c0_i32 : i32
  }
  func.func @transform_7(%arg0: i32) -> i32 {
    %c0_i32 = arith.constant 0 : i32
    %c0_i32_0 = arith.constant 0 : i32
    return %c0_i32 : i32
  }
  func.func @transform_8(%arg0: i32) -> (i32, i32, i32) {
    %c0_i32 = arith.constant 0 : i32
    %c0_i32_0 = arith.constant 0 : i32
    %c0_i32_1 = arith.constant 0 : i32
    return %arg0, %c0_i32, %c0_i32_0 : i32, i32, i32
  }
}

</mosaic_0001>

<llo_original>
// kernel: cbam_forward.1
$region0: #{cbam_forward.1}
  #allocation0 [shape = 'u32[]', space=smem, size = 0x4, offset = 0x4, fixed_abs, tag = 'smem constant byte address 0x4 - core index']
  #allocation1 [shape = 'u32[144,128]{1,0:T(1,128)}', space=vmem, size = 0x12000, scoped, tag = 'internal scratch']
  #allocation2 [shape = 'f32[2,358]{1,0:T(2,128)}', space=vmem, size = 0xc00, scoped, tag = 'scratch operand']
  #allocation3 [shape = 'f32[1]{0:T(128)S(6)}', space=smem, size = 0x200, scoped, tag = 'scoped memory for cbam_forward.1']
  %s0 = inlined_call_operand.vmem [shape: f32[2,32,256], index: 0, kind: input, shape index: {}]
  %s1 = inlined_call_operand.vmem [shape: f32[2,32], index: 1, kind: input, shape index: {}]
  %s2 = inlined_call_operand.vmem [shape: f32[2,1], index: 2, kind: input, shape index: {}]
  %s3 = inlined_call_operand.vmem [shape: f32[32,2], index: 3, kind: input, shape index: {}]
  %s4 = inlined_call_operand.vmem [shape: f32[32,1], index: 4, kind: input, shape index: {}]
  %s5 = inlined_call_operand.vmem [shape: f32[7,256], index: 5, kind: input, shape index: {}]
  %s6 = inlined_call_operand.vmem [shape: f32[98], index: 6, kind: input, shape index: {}]
  %s7 = inlined_call_operand.<no memory space> [shape: f32[1], index: 7, kind: input, shape index: {}]
  %s8 = inlined_call_operand.vmem [shape: f32[2,32,256], index: 8, kind: output, shape index: {}]
  %s9 = sld [smem:[#allocation0]]
  $region69: #{cbam_forward.1} parent=0
    _
  %s11 = ssub.s32 1, %s9
  %s12 = scalar_select 0, %s11, %s9
  %13 = sst [smem:[#allocation3]] %s7
  $region1: #{cbam_forward.1} parent=0
    #allocation4 [shape = 'u8[512]{0}', space=smem, size = 0x200, scoped, tag = 'input window, operand 6, single buffered']
    #allocation5 [shape = 's32[2]{0}', space=sflag, size = 0x8, scoped, tag = 'scoped memory for cbam_forward.1']
    %14 = vsyncpa [#allocation5], 0
    loop: start=0, step=1, limit=4
    $region2: #{cbam_forward.1} parent=1 // loop_pre_header
      _
    $region3: #{cbam_forward.1} parent=1 // loop_header
      %s16 = sphi 0, %s20
      %p17 = scmp.ge.s32.totalorder %s16, 4
      %s26 = sphi 0, %s28
      %s29 = sphi 0, %s26
      %s30 = sphi 0, %s29
      %s46 = sphi 0, %s30
      %s50 = sphi 0, %s50
      %s52 = sphi 0, %s50
      %s53 = sphi 0, %s52
      %s67 = sphi 0, %s53
      %s71 = sphi 0, %s71
      %s73 = sphi 0, %s71
      %s74 = sphi 0, %s73
      %s88 = sphi 0, %s74
      %s92 = sphi 0, %s92
      %s94 = sphi 0, %s92
      %s95 = sphi 0, %s94
      %s109 = sphi 0, %s95
      %s113 = sphi 0, %s113
      %s115 = sphi 0, %s113
      %s116 = sphi 0, %s115
      %s130 = sphi 0, %s116
      %s134 = sphi 0, %s134
      %s136 = sphi 0, %s134
      %s137 = sphi 0, %s136
      %s151 = sphi 0, %s137
      %s155 = sphi 0, %s155
      %s157 = sphi 0, %s155
      %s158 = sphi 0, %s157
      %s172 = sphi 0, %s158
      %s176 = sphi 0, %s176
      %s178 = sphi 0, %s176
      %s179 = sphi 0, %s178
      %s193 = sphi 0, %s179
      %s199 = sphi 0, %s201
      %s202 = sphi 0, %s199
      %s203 = sphi 0, %s202
      %s219 = sphi 0, %s203
    $region4: #{cbam_forward.1} parent=1 // loop_header_branch
      %19 = sbr.rel (%p17) target = $region8
    $region5: #{cbam_forward.1} parent=1 // loop_body
      %s21 = ssub.s32 %s16, 1
      %s22 = ssub.s32 %s16, 2
      %s23 = sadd.s32 %s16, 1
      %s24 = ssub.s32 %s16, %s23
      %p25 = scmp.eq.s32.totalorder %s24, 0
      %s27 = sadd.s32 %s26, 1
      %s28 = scalar_select %p25, %s26, %s27
      %p31 = pneg %p25
      %p32 = scmp.eq.s32.totalorder %s16, 1
      %p33 = por %p31, %p32
      %p34 = scmp.ne.s32.totalorder %s26, %s29
      %p35 = scmp.eq.s32.totalorder %s16, 0
      %p36 = por %p34, %p35
      %p37 = scmp.ne.s32.totalorder %s26, %s29
      %p38 = scmp.eq.s32.totalorder %s21, 1
      %p39 = por %p37, %p38
      %p40 = scmp.ne.s32.totalorder %s29, %s30
      %p41 = scmp.eq.s32.totalorder %s21, 0
      %p42 = por %p40, %p41
      %p43 = scmp.ne.s32.totalorder %s29, %s30
      %p44 = scmp.eq.s32.totalorder %s22, 1
      %p45 = por %p43, %p44
      %p47 = scmp.ne.s32.totalorder %s30, %s46
      %p48 = scmp.eq.s32.totalorder %s22, 0
      %p49 = por %p47, %p48
      %s51 = sadd.s32 %s50, 1
      %p54 = scmp.eq.s32.totalorder %s16, 1
      %p55 = scmp.ne.s32.totalorder %s50, %s52
      %p56 = scmp.eq.s32.totalorder %s16, 0
      %p57 = por %p55, %p56
      %p58 = scmp.ne.s32.totalorder %s50, %s52
      %p59 = scmp.eq.s32.totalorder %s21, 1
      %p60 = por %p58, %p59
      %p61 = scmp.ne.s32.totalorder %s52, %s53
      %p62 = scmp.eq.s32.totalorder %s21, 0
      %p63 = por %p61, %p62
      %p64 = scmp.ne.s32.totalorder %s52, %s53
      %p65 = scmp.eq.s32.totalorder %s22, 1
      %p66 = por %p64, %p65
      %p68 = scmp.ne.s32.totalorder %s53, %s67
      %p69 = scmp.eq.s32.totalorder %s22, 0
      %p70 = por %p68, %p69
      %s72 = sadd.s32 %s71, 1
      %p75 = scmp.eq.s32.totalorder %s16, 1
      %p76 = scmp.ne.s32.totalorder %s71, %s73
      %p77 = scmp.eq.s32.totalorder %s16, 0
      %p78 = por %p76, %p77
      %p79 = scmp.ne.s32.totalorder %s71, %s73
      %p80 = scmp.eq.s32.totalorder %s21, 1
      %p81 = por %p79, %p80
      %p82 = scmp.ne.s32.totalorder %s73, %s74
      %p83 = scmp.eq.s32.totalorder %s21, 0
      %p84 = por %p82, %p83
      %p85 = scmp.ne.s32.totalorder %s73, %s74
      %p86 = scmp.eq.s32.totalorder %s22, 1
      %p87 = por %p85, %p86
      %p89 = scmp.ne.s32.totalorder %s74, %s88
      %p90 = scmp.eq.s32.totalorder %s22, 0
      %p91 = por %p89, %p90
      %s93 = sadd.s32 %s92, 1
      %p96 = scmp.eq.s32.totalorder %s16, 1
      %p97 = scmp.ne.s32.totalorder %s92, %s94
      %p98 = scmp.eq.s32.totalorder %s16, 0
      %p99 = por %p97, %p98
      %p100 = scmp.ne.s32.totalorder %s92, %s94
      %p101 = scmp.eq.s32.totalorder %s21, 1
      %p102 = por %p100, %p101
      %p103 = scmp.ne.s32.totalorder %s94, %s95
      %p104 = scmp.eq.s32.totalorder %s21, 0
      %p105 = por %p103, %p104
      %p106 = scmp.ne.s32.totalorder %s94, %s95
      %p107 = scmp.eq.s32.totalorder %s22, 1
      %p108 = por %p106, %p107
      %p110 = scmp.ne.s32.totalorder %s95, %s109
      %p111 = scmp.eq.s32.totalorder %s22, 0
      %p112 = por %p110, %p111
      %s114 = sadd.s32 %s113, 1
      %p117 = scmp.eq.s32.totalorder %s16, 1
      %p118 = scmp.ne.s32.totalorder %s113, %s115
      %p119 = scmp.eq.s32.totalorder %s16, 0
      %p120 = por %p118, %p119
      %p121 = scmp.ne.s32.totalorder %s113, %s115
      %p122 = scmp.eq.s32.totalorder %s21, 1
      %p123 = por %p121, %p122
      %p124 = scmp.ne.s32.totalorder %s115, %s116
      %p125 = scmp.eq.s32.totalorder %s21, 0
      %p126 = por %p124, %p125
      %p127 = scmp.ne.s32.totalorder %s115, %s116
      %p128 = scmp.eq.s32.totalorder %s22, 1
      %p129 = por %p127, %p128
      %p131 = scmp.ne.s32.totalorder %s116, %s130
      %p132 = scmp.eq.s32.totalorder %s22, 0
      %p133 = por %p131, %p132
      %s135 = sadd.s32 %s134, 1
      %p138 = scmp.eq.s32.totalorder %s16, 1
      %p139 = scmp.ne.s32.totalorder %s134, %s136
      %p140 = scmp.eq.s32.totalorder %s16, 0
      %p141 = por %p139, %p140
      %p142 = scmp.ne.s32.totalorder %s134, %s136
      %p143 = scmp.eq.s32.totalorder %s21, 1
      %p144 = por %p142, %p143
      %p145 = scmp.ne.s32.totalorder %s136, %s137
      %p146 = scmp.eq.s32.totalorder %s21, 0
      %p147 = por %p145, %p146
      %p148 = scmp.ne.s32.totalorder %s136, %s137
      %p149 = scmp.eq.s32.totalorder %s22, 1
      %p150 = por %p148, %p149
      %p152 = scmp.ne.s32.totalorder %s137, %s151
      %p153 = scmp.eq.s32.totalorder %s22, 0
      %p154 = por %p152, %p153
      %s156 = sadd.s32 %s155, 1
      %p159 = scmp.eq.s32.totalorder %s16, 1
      %p160 = scmp.ne.s32.totalorder %s155, %s157
      %p161 = scmp.eq.s32.totalorder %s16, 0
      %p162 = por %p160, %p161
      %p163 = scmp.ne.s32.totalorder %s155, %s157
      %p164 = scmp.eq.s32.totalorder %s21, 1
      %p165 = por %p163, %p164
      %p166 = scmp.ne.s32.totalorder %s157, %s158
      %p167 = scmp.eq.s32.totalorder %s21, 0
      %p168 = por %p166, %p167
      %p169 = scmp.ne.s32.totalorder %s157, %s158
      %p170 = scmp.eq.s32.totalorder %s22, 1
      %p171 = por %p169, %p170
      %p173 = scmp.ne.s32.totalorder %s158, %s172
      %p174 = scmp.eq.s32.totalorder %s22, 0
      %p175 = por %p173, %p174
      %s177 = sadd.s32 %s176, 1
      %p180 = scmp.eq.s32.totalorder %s16, 1
      %p181 = scmp.ne.s32.totalorder %s176, %s178
      %p182 = scmp.eq.s32.totalorder %s16, 0
      %p183 = por %p181, %p182
      %p184 = scmp.ne.s32.totalorder %s176, %s178
      %p185 = scmp.eq.s32.totalorder %s21, 1
      %p186 = por %p184, %p185
      %p187 = scmp.ne.s32.totalorder %s178, %s179
      %p188 = scmp.eq.s32.totalorder %s21, 0
      %p189 = por %p187, %p188
      %p190 = scmp.ne.s32.totalorder %s178, %s179
      %p191 = scmp.eq.s32.totalorder %s22, 1
      %p192 = por %p190, %p191
      %p194 = scmp.ne.s32.totalorder %s179, %s193
      %p195 = scmp.eq.s32.totalorder %s22, 0
      %p196 = por %p194, %p195
      %s197 = ssub.s32 %s16, %s23
      %p198 = scmp.eq.s32.totalorder %s197, 0
      %s200 = sadd.s32 %s199, 1
      %s201 = scalar_select %p198, %s199, %s200
      %p204 = pneg %p198
      %p205 = scmp.eq.s32.totalorder %s16, 1
      %p206 = por %p204, %p205
      %p207 = scmp.ne.s32.totalorder %s199, %s202
      %p208 = scmp.eq.s32.totalorder %s16, 0
      %p209 = por %p207, %p208
      %p210 = scmp.ne.s32.totalorder %s199, %s202
      %p211 = scmp.eq.s32.totalorder %s21, 1
      %p212 = por %p210, %p211
      %p213 = scmp.ne.s32.totalorder %s202, %s203
      %p214 = scmp.eq.s32.totalorder %s21, 0
      %p215 = por %p213, %p214
      %p216 = scmp.ne.s32.totalorder %s202, %s203
      %p217 = scmp.eq.s32.totalorder %s22, 1
      %p218 = por %p216, %p217
      %p220 = scmp.ne.s32.totalorder %s203, %s219
      %p221 = scmp.eq.s32.totalorder %s22, 0
      %p222 = por %p220, %p221
      %p223 = scmp.le.s32.totalorder 1, %s16
      %p224 = scmp.lt.s32.totalorder %s16, 3
      %p225 = pnand %p223, %p224
      %p226 = pneg %p225
      // Predicated region
      $region9: #{cbam_forward.1} parent=5 // pred_check
        _
      $region10: #{cbam_forward.1} parent=5 // pred_check_branch
        %228 = sbr.rel (%p225) target = $region12
      $region11: #{cbam_forward.1} parent=5 // pred_region
        %s229 = ssub.s32 %s16, 1
        // Predicated region
        $region13: #{cbam_forward.1} parent=11 // pred_check
          %p230 = pneg %p63
        $region14: #{cbam_forward.1} parent=11 // pred_check_branch
          %232 = sbr.rel (%p230) target = $region16
        $region15: #{cbam_forward.1} parent=11 // pred_region
          _
        $region16: #{cbam_forward.1} parent=11 // pred_fallthru
          _
        // Predicated region
        $region17: #{cbam_forward.1} parent=11 // pred_check
          %p233 = pneg %p84
        $region18: #{cbam_forward.1} parent=11 // pred_check_branch
          %235 = sbr.rel (%p233) target = $region20
        $region19: #{cbam_forward.1} parent=11 // pred_region
          _
        $region20: #{cbam_forward.1} parent=11 // pred_fallthru
          _
        // Predicated region
        $region21: #{cbam_forward.1} parent=11 // pred_check
          %p236 = pneg %p105
        $region22: #{cbam_forward.1} parent=11 // pred_check_branch
          %238 = sbr.rel (%p236) target = $region24
        $region23: #{cbam_forward.1} parent=11 // pred_region
          _
        $region24: #{cbam_forward.1} parent=11 // pred_fallthru
          _
        // Predicated region
        $region25: #{cbam_forward.1} parent=11 // pred_check
          %p239 = pneg %p126
        $region26: #{cbam_forward.1} parent=11 // pred_check_branch
          %241 = sbr.rel (%p239) target = $region28
        $region27: #{cbam_forward.1} parent=11 // pred_region
          _
        $region28: #{cbam_forward.1} parent=11 // pred_fallthru
          _
        // Predicated region
        $region29: #{cbam_forward.1} parent=11 // pred_check
          %p242 = pneg %p147
        $region30: #{cbam_forward.1} parent=11 // pred_check_branch
          %244 = sbr.rel (%p242) target = $region32
        $region31: #{cbam_forward.1} parent=11 // pred_region
          _
        $region32: #{cbam_forward.1} parent=11 // pred_fallthru
          _
        // Predicated region
        $region33: #{cbam_forward.1} parent=11 // pred_check
          %p245 = pneg %p168
        $region34: #{cbam_forward.1} parent=11 // pred_check_branch
          %247 = sbr.rel (%p245) target = $region36
        $region35: #{cbam_forward.1} parent=11 // pred_region
          %s249 = ssub.s32 16, 16
          %250 = vsyncadd [#allocation5], %s249
          %s252 = sshll.u32 %s6, 4
          %s253 = int_to_ptr.vmem [resolvable:$true] %s252
          %255 = dma.vmem_to_smem %s253, 16, [#allocation4], [#allocation5]
        $region36: #{cbam_forward.1} parent=11 // pred_fallthru
          _
        // Predicated region
        $region37: #{cbam_forward.1} parent=11 // pred_check
          %p256 = pneg %p189
        $region38: #{cbam_forward.1} parent=11 // pred_check_branch
          %258 = sbr.rel (%p256) target = $region40
        $region39: #{cbam_forward.1} parent=11 // pred_region
          _
        $region40: #{cbam_forward.1} parent=11 // pred_fallthru
          _
      $region12: #{cbam_forward.1} parent=5 // pred_fallthru
        _
      %p259 = scmp.lt.s32.totalorder %s16, 2
      // Predicated region
      $region41: #{cbam_forward.1} parent=5 // pred_check
        %p260 = pneg %p259
      $region42: #{cbam_forward.1} parent=5 // pred_check_branch
        %262 = sbr.rel (%p260) target = $region44
      $region43: #{cbam_forward.1} parent=5 // pred_region
        // Predicated region
        $region45: #{cbam_forward.1} parent=43 // pred_check
          %p263 = pneg %p36
        $region46: #{cbam_forward.1} parent=43 // pred_check_branch
          %265 = sbr.rel (%p263) target = $region48
        $region47: #{cbam_forward.1} parent=43 // pred_region
          %p266 = scmp.lt.s32.totalorder %s16, 1
          %s267 = scalar_select %p266, %s16, 1
          %s268 = smul.addr %s267, 8
          %s269 = smul.addr %s268, 8
          %s270 = scalar_lea.vmem %s0, %s269
        $region48: #{cbam_forward.1} parent=43 // pred_fallthru
          _
      $region44: #{cbam_forward.1} parent=5 // pred_fallthru
        _
      %p271 = scmp.le.s32.totalorder 1, %s16
      %p272 = scmp.lt.s32.totalorder %s16, 3
      %p273 = pnand %p271, %p272
      %p274 = pneg %p273
      // Predicated region
      $region49: #{cbam_forward.1} parent=5 // pred_check
        _
      $region50: #{cbam_forward.1} parent=5 // pred_check_branch
        %276 = sbr.rel (%p273) target = $region52
      $region51: #{cbam_forward.1} parent=5 // pred_region
        %s277 = ssub.s32 %s16, 1
        // Predicated region
        $region53: #{cbam_forward.1} parent=51 // pred_check
          %p278 = pneg %p168
        $region54: #{cbam_forward.1} parent=51 // pred_check_branch
          %280 = sbr.rel (%p278) target = $region56
        $region55: #{cbam_forward.1} parent=51 // pred_region
          %281 = dma.done [#allocation5], 16
        $region56: #{cbam_forward.1} parent=51 // pred_fallthru
          _
        %282 = sfence
        %p283 = scmp.lt.s32.totalorder %s21, 1
        %s284 = scalar_select %p283, %s21, 1
        %s285 = smul.addr %s284, 8
        %s286 = smul.addr %s285, 8
        %s287 = scalar_lea.vmem %s0, %s286
        %p288 = pneg %p42
        %p289 = pneg %p39
        %p290 = pneg %p63
        %p291 = pneg %p60
        %p292 = pneg %p84
        %p293 = pneg %p81
        %p294 = pneg %p105
        %p295 = pneg %p102
        %p296 = pneg %p126
        %p297 = pneg %p123
        %p298 = pneg %p147
        %p299 = pneg %p144
        %p300 = pneg %p168
        %p301 = pneg %p165
        %p302 = pneg %p189
        %p303 = pneg %p186
        %p304 = pneg %p215
        %p305 = pneg %p212
        %p306 = scmp.lt.s32.totalorder %s21, 1
        %s307 = scalar_select %p306, %s21, 1
        %s308 = smul.addr %s307, 8
        %s309 = smul.addr %s308, 8
        %s310 = scalar_lea.vmem %s8, %s309
        %p311 = scmp.lt.s32.totalorder %s21, 1
        %s312 = scalar_select %p311, %s21, 1
        %s313 = smul.addr %s312, 8
        %s314 = smul.addr %s313, 8
        %s315 = scalar_lea.vmem %s0, %s314
        %p316 = scmp.lt.s32.totalorder %s21, 1
        %s317 = scalar_select %p316, %s21, 1
        %s318 = smul.addr %s317, 8
        %s319 = smul.addr %s318, 8
        %s320 = scalar_lea.vmem %s8, %s319
        %v321 = vld [vmem:[%s315] sm:$0xff]
        %v322 = vld [vmem:[%s315 + $0x8] sm:$0xff]
        %v323 = vld [vmem:[%s315 + $0x10] sm:$0xff]
        %v324 = vld [vmem:[%s315 + $0x18] sm:$0xff]
        %v325 = vld [vmem:[%s315 + $0x20] sm:$0xff]
        %v326 = vld [vmem:[%s315 + $0x28] sm:$0xff]
        %v327 = vld [vmem:[%s315 + $0x30] sm:$0xff]
        %v328 = vld [vmem:[%s315 + $0x38] sm:$0xff]
        %v329 = vadd.f32 %v321, %v322
        %330 = vadd.xlane.f32.xlu0 %v329
        %v331 = vpop.xlane.xlu0 %330
        %v332 = vadd.f32 %v323, %v324
        %333 = vadd.xlane.f32.xlu0 %v332
        %v334 = vpop.xlane.xlu0 %333
        %v335 = vadd.f32 %v325, %v326
        %336 = vadd.xlane.f32.xlu0 %v335
        %v337 = vpop.xlane.xlu0 %336
        %v338 = vadd.f32 %v327, %v328
        %339 = vadd.xlane.f32.xlu0 %v338
        %v340 = vpop.xlane.xlu0 %339
        %v341 = vmul.f32 %v331, 0.00390625
        %v342 = vmul.f32 %v334, 0.00390625
        %v343 = vmul.f32 %v337, 0.00390625
        %v344 = vmul.f32 %v340, 0.00390625
        %v345 = vmax.f32 %v321, %v322
        %346 = vmax.xlane.f32.xlu0 %v345
        %v347 = vpop.xlane.xlu0 %346
        %v348 = vmax.f32 %v323, %v324
        %349 = vmax.xlane.f32.xlu0 %v348
        %v350 = vpop.xlane.xlu0 %349
        %v351 = vmax.f32 %v325, %v326
        %352 = vmax.xlane.f32.xlu0 %v351
        %v353 = vpop.xlane.xlu0 %352
        %v354 = vmax.f32 %v327, %v328
        %355 = vmax.xlane.f32.xlu0 %v354
        %v356 = vpop.xlane.xlu0 %355
        %v357 = vlaneseq
        %v358 = vand.u32 %v357, 127
        %vm359 = vcmp.eq.s32.totalorder %v358, 0
        %v360 = vsel %vm359, %v341, %v347
        %v361 = vsel %vm359, %v342, %v350
        %v362 = vsel %vm359, %v343, %v353
        %v363 = vsel %vm359, %v344, %v356
        %v364 = vld [vmem:[%s1] sm:$0x3]
        %v365 = vld [vmem:[%s2] sm:$0x3]
        %367 = vset.pattern.permute.xlu0 0
        %368 = vperm.xlu0 %367, %v365
        %v369 = vpop.permute.xlu0 %368
        %vm371 = vcmask 261120
        %v373 = vsel %vm371, %v364, 0
        %375 = vmatprep.subr.mxu0 0.0
        %376 = vmatpush1.msra.mxu0 0.0
        %377 = vmatprep.subr.mxu0 0.0
        %378 = vmatpush1.msra.mxu0 0.0
        %379 = vmatprep.subr.mxu0 0.0
        %380 = vmatpush1.msra.mxu0 0.0
        %381 = vmatprep.subr.mxu0 0.0
        %382 = vmatpush1.msra.mxu0 0.0
        %383 = vmatprep.subr.mxu0 0.0
        %384 = vmatpush1.msra.mxu0 0.0
        %385 = vmatprep.subr.mxu0 0.0
        %386 = vmatpush1.msra.mxu0 0.0
        %387 = vmatprep.subr.mxu0 0.0
        %388 = vmatpush1.msra.mxu0 0.0
        %389 = vmatprep.subr.mxu0 0.0
        %390 = vmatpush1.msra.mxu0 0.0
        %391 = vmatprep.subr.mxu0 0.0
        %392 = vmatpush1.msra.mxu0 0.0
        %393 = vmatprep.subr.mxu0 0.0
        %394 = vmatpush1.msra.mxu0 0.0
        %395 = vmatprep.subr.mxu0 0.0
        %396 = vmatpush1.msra.mxu0 0.0
        %397 = vmatprep.subr.mxu0 0.0
        %398 = vmatpush1.msra.mxu0 0.0
        %399 = vmatprep.subr.mxu0 0.0
        %400 = vmatpush1.msra.mxu0 %v363
        %401 = vmatprep.subr.mxu0 0.0
        %402 = vmatpush1.msra.mxu0 %v362
        %403 = vmatprep.subr.mxu0 0.0
        %404 = vmatpush1.msra.mxu0 %v361
        %405 = vmatprep.subr.mxu0 0.0
        %406 = vmatpush1.msra.mxu0 %v360
        %407 = vmatprep.subr.mxu0 0.0
        %408 = vmatpush2.msra.mxu0 0.0
        %409 = vmatprep.subr.mxu0 0.0
        %410 = vmatpush2.msra.mxu0 0.0
        %411 = vmatprep.subr.mxu0 0.0
        %412 = vmatpush2.msra.mxu0 0.0
        %413 = vmatprep.subr.mxu0 0.0
        %414 = vmatpush2.msra.mxu0 0.0
        %415 = vmatprep.subr.mxu0 0.0
        %416 = vmatpush2.msra.mxu0 0.0
        %417 = vmatprep.subr.mxu0 0.0
        %418 = vmatpush2.msra.mxu0 0.0
        %419 = vmatprep.subr.mxu0 0.0
        %420 = vmatpush2.msra.mxu0 0.0
        %421 = vmatprep.subr.mxu0 0.0
        %422 = vmatpush2.msra.mxu0 0.0
        %423 = vmatprep.subr.mxu0 0.0
        %424 = vmatpush2.msra.mxu0 0.0
        %425 = vmatprep.subr.mxu0 0.0
        %426 = vmatpush2.msra.mxu0 0.0
        %427 = vmatprep.subr.mxu0 0.0
        %428 = vmatpush2.msra.mxu0 0.0
        %429 = vmatprep.subr.mxu0 0.0
        %430 = vmatpush2.msra.mxu0 0.0
        %431 = vmatprep.subr.mxu0 0.0
        %432 = vmatpush2.msra.mxu0 0.0
        %433 = vmatprep.subr.mxu0 0.0
        %434 = vmatpush2.msra.mxu0 0.0
        %435 = vmatprep.subr.mxu0 0.0
        %436 = vmatpush2.msra.mxu0 0.0
        %437 = vmatprep.subr.mxu0 0.0
        %438 = vmatpush2.msra.mxu0 0.0
        %439 = vmatprep.mubr.f32.mxu0 0.0
        %440 = vmatmul.mubr.f32.gmra.mxu0 %v373
        %v441 = vpop.f32.mrf.mxu0
        %v442 = vadd.f32 %v369, %v441
        %v443 = vpop.f32.mrf.mxu0
        %444 = vdwg.mxu0
        %v445 = vmax.f32 %v442, 0.0
        %v446 = vld [vmem:[%s3] sm:$0xff]
        %v447 = vld [vmem:[%s3 + $0x8] sm:$0xff]
        %v448 = vld [vmem:[%s3 + $0x10] sm:$0xff]
        %v449 = vld [vmem:[%s3 + $0x18] sm:$0xff]
        %v450 = vld [vmem:[%s4] sm:$0xff]
        %v451 = vld [vmem:[%s4 + $0x8] sm:$0xff]
        %v452 = vld [vmem:[%s4 + $0x10] sm:$0xff]
        %v453 = vld [vmem:[%s4 + $0x18] sm:$0xff]
        %455 = vset.pattern.permute.xlu0 0
        %456 = vperm.xlu0 %455, %v450
        %v457 = vpop.permute.xlu0 %456
        %460 = vset.pattern.permute.xlu0 0
        %461 = vperm.xlu0 %460, %v451
        %v462 = vpop.permute.xlu0 %461
        %465 = vset.pattern.permute.xlu0 0
        %466 = vperm.xlu0 %465, %v452
        %v467 = vpop.permute.xlu0 %466
        %470 = vset.pattern.permute.xlu0 0
        %471 = vperm.xlu0 %470, %v453
        %v472 = vpop.permute.xlu0 %471
        %vm474 = vcmask 15360
        %v476 = vsel %vm474, %v446, 0
        %v479 = vsel %vm474, %v447, 0
        %v482 = vsel %vm474, %v448, 0
        %v485 = vsel %vm474, %v449, 0
        %vm487 = vcmask 1041408
        %v489 = vsel %vm487, %v445, 0
        %491 = vmatprep.subr.mxu0 0.0
        %492 = vmatpush1.msra.mxu0 0.0
        %493 = vmatprep.subr.mxu0 0.0
        %494 = vmatpush1.msra.mxu0 0.0
        %495 = vmatprep.subr.mxu0 0.0
        %496 = vmatpush1.msra.mxu0 0.0
        %497 = vmatprep.subr.mxu0 0.0
        %498 = vmatpush1.msra.mxu0 0.0
        %499 = vmatprep.subr.mxu0 0.0
        %500 = vmatpush1.msra.mxu0 0.0
        %501 = vmatprep.subr.mxu0 0.0
        %502 = vmatpush1.msra.mxu0 0.0
        %503 = vmatprep.subr.mxu0 0.0
        %504 = vmatpush1.msra.mxu0 0.0
        %505 = vmatprep.subr.mxu0 0.0
        %506 = vmatpush1.msra.mxu0 0.0
        %507 = vmatprep.subr.mxu0 0.0
        %508 = vmatpush1.msra.mxu0 0.0
        %509 = vmatprep.subr.mxu0 0.0
        %510 = vmatpush1.msra.mxu0 0.0
        %511 = vmatprep.subr.mxu0 0.0
        %512 = vmatpush1.msra.mxu0 0.0
        %513 = vmatprep.subr.mxu0 0.0
        %514 = vmatpush1.msra.mxu0 0.0
        %515 = vmatprep.subr.mxu0 0.0
        %516 = vmatpush1.msra.mxu0 0.0
        %517 = vmatprep.subr.mxu0 0.0
        %518 = vmatpush1.msra.mxu0 0.0
        %519 = vmatprep.subr.mxu0 0.0
        %520 = vmatpush1.msra.mxu0 0.0
        %521 = vmatprep.subr.mxu0 0.0
        %522 = vmatpush1.msra.mxu0 %v489
        %523 = vmatprep.subr.mxu0 0.0
        %524 = vmatpush2.msra.mxu0 0.0
        %525 = vmatprep.subr.mxu0 0.0
        %526 = vmatpush2.msra.mxu0 0.0
        %527 = vmatprep.subr.mxu0 0.0
        %528 = vmatpush2.msra.mxu0 0.0
        %529 = vmatprep.subr.mxu0 0.0
        %530 = vmatpush2.msra.mxu0 0.0
        %531 = vmatprep.subr.mxu0 0.0
        %532 = vmatpush2.msra.mxu0 0.0
        %533 = vmatprep.subr.mxu0 0.0
        %534 = vmatpush2.msra.mxu0 0.0
        %535 = vmatprep.subr.mxu0 0.0
        %536 = vmatpush2.msra.mxu0 0.0
        %537 = vmatprep.subr.mxu0 0.0
        %538 = vmatpush2.msra.mxu0 0.0
        %539 = vmatprep.subr.mxu0 0.0
        %540 = vmatpush2.msra.mxu0 0.0
        %541 = vmatprep.subr.mxu0 0.0
        %542 = vmatpush2.msra.mxu0 0.0
        %543 = vmatprep.subr.mxu0 0.0
        %544 = vmatpush2.msra.mxu0 0.0
        %545 = vmatprep.subr.mxu0 0.0
        %546 = vmatpush2.msra.mxu0 0.0
        %547 = vmatprep.subr.mxu0 0.0
        %548 = vmatpush2.msra.mxu0 0.0
        %549 = vmatprep.subr.mxu0 0.0
        %550 = vmatpush2.msra.mxu0 0.0
        %551 = vmatprep.subr.mxu0 0.0
        %552 = vmatpush2.msra.mxu0 0.0
        %553 = vmatprep.subr.mxu0 0.0
        %554 = vmatpush2.msra.mxu0 0.0
        %555 = vmatprep.mubr.f32.mxu0 0.0
        %556 = vmatmul.mubr.f32.gmra.mxu0 %v476
        %v557 = vpop.f32.mrf.mxu0
        %v558 = vadd.f32 %v457, %v557
        %v559 = vpop.f32.mrf.mxu0
        %560 = vmatprep.mubr.f32.mxu0 0.0
        %561 = vmatmul.mubr.f32.gmra.mxu0 %v479
        %v562 = vpop.f32.mrf.mxu0
        %v563 = vadd.f32 %v462, %v562
        %v564 = vpop.f32.mrf.mxu0
        %565 = vmatprep.mubr.f32.mxu0 0.0
        %566 = vmatmul.mubr.f32.gmra.mxu0 %v482
        %v567 = vpop.f32.mrf.mxu0
        %v568 = vadd.f32 %v467, %v567
        %v569 = vpop.f32.mrf.mxu0
        %570 = vmatprep.mubr.f32.mxu0 0.0
        %571 = vmatmul.mubr.f32.gmra.mxu0 %v485
        %v572 = vpop.f32.mrf.mxu0
        %v573 = vadd.f32 %v472, %v572
        %v574 = vpop.f32.mrf.mxu0
        %575 = vdwg.mxu0
        %580 = vrot.lane.b32.xlu0 %v558, 127
        %v581 = vpop.permute.xlu0 %580
        %582 = vrot.lane.b32.xlu0 %v563, 127
        %v583 = vpop.permute.xlu0 %582
        %584 = vrot.lane.b32.xlu0 %v568, 127
        %v585 = vpop.permute.xlu0 %584
        %586 = vrot.lane.b32.xlu0 %v573, 127
        %v587 = vpop.permute.xlu0 %586
        %v592 = vadd.f32 %v558, %v581
        %v593 = vadd.f32 %v563, %v583
        %v594 = vadd.f32 %v568, %v585
        %v595 = vadd.f32 %v573, %v587
        %v596 = vxor.u32 %v592, 2147483648
        %v597 = vxor.u32 %v593, 2147483648
        %v598 = vxor.u32 %v594, 2147483648
        %v599 = vxor.u32 %v595, 2147483648
        %v600 = vmul.f32 %v596, 1.442695
        %v601 = vpow.pop %v600
        %v602 = vmul.f32 %v597, 1.442695
        %v603 = vpow.pop %v602
        %v604 = vmul.f32 %v598, 1.442695
        %v605 = vpow.pop %v604
        %v606 = vmul.f32 %v599, 1.442695
        %v607 = vpow.pop %v606
        %v608 = vadd.f32 %v601, 1.0
        %v609 = vadd.f32 %v603, 1.0
        %v610 = vadd.f32 %v605, 1.0
        %v611 = vadd.f32 %v607, 1.0
        %v612 = vrcp.pop %v608
        %v613 = vmul.f32 1.0, %v612
        %v614 = vrcp.pop %v609
        %v615 = vmul.f32 1.0, %v614
        %v616 = vrcp.pop %v610
        %v617 = vmul.f32 1.0, %v616
        %v618 = vrcp.pop %v611
        %v619 = vmul.f32 1.0, %v618
        %621 = vset.pattern.permute.xlu0 0
        %622 = vperm.xlu0 %621, %v613
        %v623 = vpop.permute.xlu0 %622
        %626 = vset.pattern.permute.xlu0 0
        %627 = vperm.xlu0 %626, %v615
        %v628 = vpop.permute.xlu0 %627
        %631 = vset.pattern.permute.xlu0 0
        %632 = vperm.xlu0 %631, %v617
        %v633 = vpop.permute.xlu0 %632
        %636 = vset.pattern.permute.xlu0 0
        %637 = vperm.xlu0 %636, %v619
        %v638 = vpop.permute.xlu0 %637
        %v640 = vmul.f32 %v321, %v623
        %v641 = vmul.f32 %v322, %v623
        %v642 = vmul.f32 %v323, %v628
        %v643 = vmul.f32 %v324, %v628
        %v644 = vmul.f32 %v325, %v633
        %v645 = vmul.f32 %v326, %v633
        %v646 = vmul.f32 %v327, %v638
        %v647 = vmul.f32 %v328, %v638
        %v648 = vmax.f32 %v640, %v644
        %v649 = vmax.f32 %v642, %v646
        %v650 = vmax.f32 %v648, %v649
        %v651 = vrot.slane %v650, 4
        %v652 = vmax.f32 %v650, %v651
        %v653 = vrot.slane %v652, 2
        %v654 = vmax.f32 %v652, %v653
        %v655 = vrot.slane %v654, 1
        %v656 = vmax.f32 %v654, %v655
        %v657 = vmax.f32 %v641, %v645
        %v658 = vmax.f32 %v643, %v647
        %v659 = vmax.f32 %v657, %v658
        %v660 = vrot.slane %v659, 4
        %v661 = vmax.f32 %v659, %v660
        %v662 = vrot.slane %v661, 2
        %v663 = vmax.f32 %v661, %v662
        %v664 = vrot.slane %v663, 1
        %v665 = vmax.f32 %v663, %v664
        %v666 = vadd.f32 %v640, %v642
        %v667 = vadd.f32 %v666, %v644
        %v668 = vadd.f32 %v667, %v646
        %v669 = vrot.slane %v668, 4
        %v670 = vadd.f32 %v668, %v669
        %v671 = vrot.slane %v670, 2
        %v672 = vadd.f32 %v670, %v671
        %v673 = vrot.slane %v672, 1
        %v674 = vadd.f32 %v672, %v673
        %v675 = vadd.f32 %v641, %v643
        %v676 = vadd.f32 %v675, %v645
        %v677 = vadd.f32 %v676, %v647
        %v678 = vrot.slane %v677, 4
        %v679 = vadd.f32 %v677, %v678
        %v680 = vrot.slane %v679, 2
        %v681 = vadd.f32 %v679, %v680
        %v682 = vrot.slane %v681, 1
        %v683 = vadd.f32 %v681, %v682
        %v684 = vmul.f32 %v674, 0.03125
        %v685 = vmul.f32 %v683, 0.03125
        %vm686 = vcmask 1043458
        %vm687 = vmor %vm686, %vm487
        %vm688 = vcmask 832516
        %vm689 = vmor %vm688, %vm687
        %690 = vst.msk [vmem:[#allocation2] sm:$0x3f] %vm689, 0.0
        %v693 = vcombine.low %v656, %v665
        %v695 = vunpack.c.l.s4 1966171168
        %v696 = vunpack.c.0.s8 %v695
        %v697 = vlaneseq
        %v698 = vshrl.u32 %v697, 7
        %v699 = vsub.s32 %v696, %v698
        %v700 = vrot.slane %v693, %v699
        %v702 = vunpack.c.l.s4 1966171168
        %v703 = vunpack.c.0.s8 %v702
        %v704 = vlaneseq
        %v705 = vshrl.u32 %v704, 7
        %v706 = vsub.s32 %v703, %v705
        %v707 = vrot.slane %v700, %v706
        %708 = vrot.lane.b32.xlu0 %v707, 51
        %v709 = vpop.permute.xlu0 %708
        %v710 = vrot.slane %v709, 7
        %vm711 = vcmask 416768
        %v712 = vsel %vm711, %v710, %v709
        %v714 = vlaneseq
        %vm715 = vcmp.ge.s32.totalorder %v714, 51
        %vm716 = vcmp.lt.s32.totalorder %v714, 307
        %vm717 = vmand %vm715, %vm716
        %718 = vst.msk [vmem:[#allocation2] ss:$2 sm:$0x7] %vm717, %v712
        %v721 = vcombine.low %v684, %v685
        %v723 = vunpack.c.l.s4 1966171168
        %v724 = vunpack.c.0.s8 %v723
        %v725 = vlaneseq
        %v726 = vshrl.u32 %v725, 7
        %v727 = vsub.s32 %v724, %v726
        %v728 = vrot.slane %v721, %v727
        %v730 = vunpack.c.l.s4 1966171168
        %v731 = vunpack.c.0.s8 %v730
        %v732 = vlaneseq
        %v733 = vshrl.u32 %v732, 7
        %v734 = vsub.s32 %v731, %v733
        %v735 = vrot.slane %v728, %v734
        %736 = vrot.lane.b32.xlu0 %v735, 51
        %v737 = vpop.permute.xlu0 %736
        %v738 = vrot.slane %v737, 7
        %v739 = vsel %vm711, %v738, %v737
        %s741 = scalar_lea.vmem [#allocation2], 1
        %742 = vst.msk [vmem:[%s741] ss:$2 sm:$0x7] %vm717, %v739
        %v743 = vld [vmem:[#allocation2] sm:$0xf]
        %s744 = sld [smem:[#allocation4]]
        %v745 = vstv %s744
        %v746 = vmul.f32 %v745, %v743
        %v747 = vadd.f32 %v746, 0.0
        %s748 = sld [smem:[#allocation4 + $0x31]]
        %v749 = vstv %s748
        %v750 = vmul.f32 %v749, %v743
        %v752 = vrot.slane %v750, 7
        %v753 = vrot.slane %v752, 2
        %v755 = vadd.f32 %v747, %v753
        %v756 = vld [vmem:[#allocation2] sm:$0x3f]
        %s757 = sld [smem:[#allocation4 + $0x7]]
        %v758 = vstv %s757
        %v759 = vmul.f32 %v758, %v756
        %761 = vrot.lane.b32.xlu0 %v759, 112
        %v762 = vpop.permute.xlu0 %761
        %v763 = vrot.slane %v762, 2
        %vm764 = vcmask 916480
        %v765 = vsel %vm764, %v762, %v763
        %v767 = vadd.f32 %v755, %v765
        %s768 = sld [smem:[#allocation4 + $0x38]]
        %v769 = vstv %s768
        %v770 = vmul.f32 %v769, %v756
        %v772 = vrot.slane %v770, 7
        %v773 = vrot.slane %v772, 2
        %774 = vrot.lane.b32.xlu0 %v773, 112
        %v775 = vpop.permute.xlu0 %774
        %v776 = vrot.slane %v775, 2
        %v777 = vsel %vm764, %v775, %v776
        %v779 = vadd.f32 %v767, %v777
        %s780 = sld [smem:[#allocation4 + $0xe]]
        %v781 = vstv %s780
        %v782 = vmul.f32 %v781, %v756
        %784 = vrot.lane.b32.xlu0 %v782, 96
        %v785 = vpop.permute.xlu0 %784
        %v786 = vrot.slane %v785, 2
        %vm787 = vcmask 785408
        %v788 = vsel %vm787, %v785, %v786
        %v790 = vadd.f32 %v779, %v788
        %s791 = sld [smem:[#allocation4 + $0x3f]]
        %v792 = vstv %s791
        %v793 = vmul.f32 %v792, %v756
        %v795 = vrot.slane %v793, 7
        %v796 = vrot.slane %v795, 2
        %797 = vrot.lane.b32.xlu0 %v796, 96
        %v798 = vpop.permute.xlu0 %797
        %v799 = vrot.slane %v798, 2
        %v800 = vsel %vm787, %v798, %v799
        %v802 = vadd.f32 %v790, %v800
        %s803 = sld [smem:[#allocation4 + $0x15]]
        %v804 = vstv %s803
        %v805 = vmul.f32 %v804, %v756
        %807 = vrot.lane.b32.xlu0 %v805, 80
        %v808 = vpop.permute.xlu0 %807
        %v809 = vrot.slane %v808, 2
        %vm810 = vcmask 654336
        %v811 = vsel %vm810, %v808, %v809
        %v813 = vadd.f32 %v802, %v811
        %s814 = sld [smem:[#allocation4 + $0x46]]
        %v815 = vstv %s814
        %v816 = vmul.f32 %v815, %v756
        %v818 = vrot.slane %v816, 7
        %v819 = vrot.slane %v818, 2
        %820 = vrot.lane.b32.xlu0 %v819, 80
        %v821 = vpop.permute.xlu0 %820
        %v822 = vrot.slane %v821, 2
        %v823 = vsel %vm810, %v821, %v822
        %v825 = vadd.f32 %v813, %v823
        %s826 = sld [smem:[#allocation4 + $0x1c]]
        %v827 = vstv %s826
        %v828 = vmul.f32 %v827, %v756
        %830 = vrot.lane.b32.xlu0 %v828, 64
        %v831 = vpop.permute.xlu0 %830
        %v832 = vrot.slane %v831, 2
        %vm833 = vcmask 523264
        %v834 = vsel %vm833, %v831, %v832
        %v836 = vadd.f32 %v825, %v834
        %s837 = sld [smem:[#allocation4 + $0x4d]]
        %v838 = vstv %s837
        %v839 = vmul.f32 %v838, %v756
        %v841 = vrot.slane %v839, 7
        %v842 = vrot.slane %v841, 2
        %843 = vrot.lane.b32.xlu0 %v842, 64
        %v844 = vpop.permute.xlu0 %843
        %v845 = vrot.slane %v844, 2
        %v846 = vsel %vm833, %v844, %v845
        %v848 = vadd.f32 %v836, %v846
        %s849 = sld [smem:[#allocation4 + $0x23]]
        %v850 = vstv %s849
        %v851 = vmul.f32 %v850, %v756
        %853 = vrot.lane.b32.xlu0 %v851, 48
        %v854 = vpop.permute.xlu0 %853
        %v855 = vrot.slane %v854, 2
        %vm856 = vcmask 392192
        %v857 = vsel %vm856, %v854, %v855
        %v859 = vadd.f32 %v848, %v857
        %s860 = sld [smem:[#allocation4 + $0x54]]
        %v861 = vstv %s860
        %v862 = vmul.f32 %v861, %v756
        %v864 = vrot.slane %v862, 7
        %v865 = vrot.slane %v864, 2
        %866 = vrot.lane.b32.xlu0 %v865, 48
        %v867 = vpop.permute.xlu0 %866
        %v868 = vrot.slane %v867, 2
        %v869 = vsel %vm856, %v867, %v868
        %v871 = vadd.f32 %v859, %v869
        %s872 = sld [smem:[#allocation4 + $0x2a]]
        %v873 = vstv %s872
        %v874 = vmul.f32 %v873, %v756
        %876 = vrot.lane.b32.xlu0 %v874, 32
        %v877 = vpop.permute.xlu0 %876
        %v878 = vrot.slane %v877, 2
        %v879 = vsel %vm371, %v877, %v878
        %v881 = vadd.f32 %v871, %v879
        %s882 = sld [smem:[#allocation4 + $0x5b]]
        %v883 = vstv %s882
        %v884 = vmul.f32 %v883, %v756
        %v886 = vrot.slane %v884, 7
        %v887 = vrot.slane %v886, 2
        %888 = vrot.lane.b32.xlu0 %v887, 32
        %v889 = vpop.permute.xlu0 %888
        %v890 = vrot.slane %v889, 2
        %v891 = vsel %vm371, %v889, %v890
        %v893 = vadd.f32 %v881, %v891
        %v894 = vld [vmem:[%s5] ss:$8 sm:$0x3]
        %v897 = vunpack.c.l.s4 857870592
        %v898 = vunpack.c.0.s8 %v897
        %v899 = vlaneseq
        %v900 = vshrl.u32 %v899, 7
        %v901 = vsub.s32 %v898, %v900
        %v902 = vrot.slane %v894, %v901
        %v904 = vmul.f32 %v893, %v902
        %v905 = vadd.f32 %v904, 0.0
        %s906 = sld [smem:[#allocation4 + $0x1]]
        %v907 = vstv %s906
        %v908 = vmul.f32 %v907, %v756
        %v909 = vadd.f32 %v908, 0.0
        %s910 = sld [smem:[#allocation4 + $0x32]]
        %v911 = vstv %s910
        %v912 = vmul.f32 %v911, %v756
        %v914 = vrot.slane %v912, 7
        %v915 = vrot.slane %v914, 2
        %v917 = vadd.f32 %v909, %v915
        %s918 = sld [smem:[#allocation4 + $0x8]]
        %v919 = vstv %s918
        %v920 = vmul.f32 %v919, %v756
        %922 = vrot.lane.b32.xlu0 %v920, 112
        %v923 = vpop.permute.xlu0 %922
        %v924 = vrot.slane %v923, 2
        %v925 = vsel %vm764, %v923, %v924
        %v927 = vadd.f32 %v917, %v925
        %s928 = sld [smem:[#allocation4 + $0x39]]
        %v929 = vstv %s928
        %v930 = vmul.f32 %v929, %v756
        %v932 = vrot.slane %v930, 7
        %v933 = vrot.slane %v932, 2
        %934 = vrot.lane.b32.xlu0 %v933, 112
        %v935 = vpop.permute.xlu0 %934
        %v936 = vrot.slane %v935, 2
        %v937 = vsel %vm764, %v935, %v936
        %v939 = vadd.f32 %v927, %v937
        %s940 = sld [smem:[#allocation4 + $0xf]]
        %v941 = vstv %s940
        %v942 = vmul.f32 %v941, %v756
        %944 = vrot.lane.b32.xlu0 %v942, 96
        %v945 = vpop.permute.xlu0 %944
        %v946 = vrot.slane %v945, 2
        %v947 = vsel %vm787, %v945, %v946
        %v949 = vadd.f32 %v939, %v947
        %s950 = sld [smem:[#allocation4 + $0x40]]
        %v951 = vstv %s950
        %v952 = vmul.f32 %v951, %v756
        %v954 = vrot.slane %v952, 7
        %v955 = vrot.slane %v954, 2
        %956 = vrot.lane.b32.xlu0 %v955, 96
        %v957 = vpop.permute.xlu0 %956
        %v958 = vrot.slane %v957, 2
        %v959 = vsel %vm787, %v957, %v958
        %v961 = vadd.f32 %v949, %v959
        %s962 = sld [smem:[#allocation4 + $0x16]]
        %v963 = vstv %s962
        %v964 = vmul.f32 %v963, %v756
        %966 = vrot.lane.b32.xlu0 %v964, 80
        %v967 = vpop.permute.xlu0 %966
        %v968 = vrot.slane %v967, 2
        %v969 = vsel %vm810, %v967, %v968
        %v971 = vadd.f32 %v961, %v969
        %s972 = sld [smem:[#allocation4 + $0x47]]
        %v973 = vstv %s972
        %v974 = vmul.f32 %v973, %v756
        %v976 = vrot.slane %v974, 7
        %v977 = vrot.slane %v976, 2
        %978 = vrot.lane.b32.xlu0 %v977, 80
        %v979 = vpop.permute.xlu0 %978
        %v980 = vrot.slane %v979, 2
        %v981 = vsel %vm810, %v979, %v980
        %v983 = vadd.f32 %v971, %v981
        %s984 = sld [smem:[#allocation4 + $0x1d]]
        %v985 = vstv %s984
        %v986 = vmul.f32 %v985, %v756
        %988 = vrot.lane.b32.xlu0 %v986, 64
        %v989 = vpop.permute.xlu0 %988
        %v990 = vrot.slane %v989, 2
        %v991 = vsel %vm833, %v989, %v990
        %v993 = vadd.f32 %v983, %v991
        %s994 = sld [smem:[#allocation4 + $0x4e]]
        %v995 = vstv %s994
        %v996 = vmul.f32 %v995, %v756
        %v998 = vrot.slane %v996, 7
        %v999 = vrot.slane %v998, 2
        %1000 = vrot.lane.b32.xlu0 %v999, 64
        %v1001 = vpop.permute.xlu0 %1000
        %v1002 = vrot.slane %v1001, 2
        %v1003 = vsel %vm833, %v1001, %v1002
        %v1005 = vadd.f32 %v993, %v1003
        %s1006 = sld [smem:[#allocation4 + $0x24]]
        %v1007 = vstv %s1006
        %v1008 = vmul.f32 %v1007, %v756
        %1010 = vrot.lane.b32.xlu0 %v1008, 48
        %v1011 = vpop.permute.xlu0 %1010
        %v1012 = vrot.slane %v1011, 2
        %v1013 = vsel %vm856, %v1011, %v1012
        %v1015 = vadd.f32 %v1005, %v1013
        %s1016 = sld [smem:[#allocation4 + $0x55]]
        %v1017 = vstv %s1016
        %v1018 = vmul.f32 %v1017, %v756
        %v1020 = vrot.slane %v1018, 7
        %v1021 = vrot.slane %v1020, 2
        %1022 = vrot.lane.b32.xlu0 %v1021, 48
        %v1023 = vpop.permute.xlu0 %1022
        %v1024 = vrot.slane %v1023, 2
        %v1025 = vsel %vm856, %v1023, %v1024
        %v1027 = vadd.f32 %v1015, %v1025
        %s1028 = sld [smem:[#allocation4 + $0x2b]]
        %v1029 = vstv %s1028
        %v1030 = vmul.f32 %v1029, %v756
        %1032 = vrot.lane.b32.xlu0 %v1030, 32
        %v1033 = vpop.permute.xlu0 %1032
        %v1034 = vrot.slane %v1033, 2
        %v1035 = vsel %vm371, %v1033, %v1034
        %v1037 = vadd.f32 %v1027, %v1035
        %s1038 = sld [smem:[#allocation4 + $0x5c]]
        %v1039 = vstv %s1038
        %v1040 = vmul.f32 %v1039, %v756
        %v1042 = vrot.slane %v1040, 7
        %v1043 = vrot.slane %v1042, 2
        %1044 = vrot.lane.b32.xlu0 %v1043, 32
        %v1045 = vpop.permute.xlu0 %1044
        %v1046 = vrot.slane %v1045, 2
        %v1047 = vsel %vm371, %v1045, %v1046
        %v1049 = vadd.f32 %v1037, %v1047
        %s1050 = scalar_lea.vmem %s5, 1
        %v1051 = vld [vmem:[%s1050] ss:$8 sm:$0x3]
        %v1054 = vunpack.c.l.s4 857870592
        %v1055 = vunpack.c.0.s8 %v1054
        %v1056 = vlaneseq
        %v1057 = vshrl.u32 %v1056, 7
        %v1058 = vsub.s32 %v1055, %v1057
        %v1059 = vrot.slane %v1051, %v1058
        %1060 = vrot.lane.b32.xlu0 %v1059, 1
        %v1061 = vpop.permute.xlu0 %1060
        %v1062 = vrot.slane %v1061, 6
        %vm1063 = vcmask 7168
        %v1064 = vsel %vm1063, %v1062, %v1061
        %v1066 = vmul.f32 %v1049, %v1064
        %1068 = vrot.lane.b32.xlu0 %v1066, 127
        %v1069 = vpop.permute.xlu0 %1068
        %v1070 = vrot.slane %v1069, 2
        %vm1071 = vcmask 1039360
        %v1072 = vsel %vm1071, %v1069, %v1070
        %v1074 = vadd.f32 %v905, %v1072
        %s1075 = sld [smem:[#allocation4 + $0x2]]
        %v1076 = vstv %s1075
        %v1077 = vmul.f32 %v1076, %v756
        %v1078 = vadd.f32 %v1077, 0.0
        %s1079 = sld [smem:[#allocation4 + $0x33]]
        %v1080 = vstv %s1079
        %v1081 = vmul.f32 %v1080, %v756
        %v1083 = vrot.slane %v1081, 7
        %v1084 = vrot.slane %v1083, 2
        %v1086 = vadd.f32 %v1078, %v1084
        %s1087 = sld [smem:[#allocation4 + $0x9]]
        %v1088 = vstv %s1087
        %v1089 = vmul.f32 %v1088, %v756
        %1091 = vrot.lane.b32.xlu0 %v1089, 112
        %v1092 = vpop.permute.xlu0 %1091
        %v1093 = vrot.slane %v1092, 2
        %v1094 = vsel %vm764, %v1092, %v1093
        %v1096 = vadd.f32 %v1086, %v1094
        %s1097 = sld [smem:[#allocation4 + $0x3a]]
        %v1098 = vstv %s1097
        %v1099 = vmul.f32 %v1098, %v756
        %v1101 = vrot.slane %v1099, 7
        %v1102 = vrot.slane %v1101, 2
        %1103 = vrot.lane.b32.xlu0 %v1102, 112
        %v1104 = vpop.permute.xlu0 %1103
        %v1105 = vrot.slane %v1104, 2
        %v1106 = vsel %vm764, %v1104, %v1105
        %v1108 = vadd.f32 %v1096, %v1106
        %s1109 = sld [smem:[#allocation4 + $0x10]]
        %v1110 = vstv %s1109
        %v1111 = vmul.f32 %v1110, %v756
        %1113 = vrot.lane.b32.xlu0 %v1111, 96
        %v1114 = vpop.permute.xlu0 %1113
        %v1115 = vrot.slane %v1114, 2
        %v1116 = vsel %vm787, %v1114, %v1115
        %v1118 = vadd.f32 %v1108, %v1116
        %s1119 = sld [smem:[#allocation4 + $0x41]]
        %v1120 = vstv %s1119
        %v1121 = vmul.f32 %v1120, %v756
        %v1123 = vrot.slane %v1121, 7
        %v1124 = vrot.slane %v1123, 2
        %1125 = vrot.lane.b32.xlu0 %v1124, 96
        %v1126 = vpop.permute.xlu0 %1125
        %v1127 = vrot.slane %v1126, 2
        %v1128 = vsel %vm787, %v1126, %v1127
        %v1130 = vadd.f32 %v1118, %v1128
        %s1131 = sld [smem:[#allocation4 + $0x17]]
        %v1132 = vstv %s1131
        %v1133 = vmul.f32 %v1132, %v756
        %1135 = vrot.lane.b32.xlu0 %v1133, 80
        %v1136 = vpop.permute.xlu0 %1135
        %v1137 = vrot.slane %v1136, 2
        %v1138 = vsel %vm810, %v1136, %v1137
        %v1140 = vadd.f32 %v1130, %v1138
        %s1141 = sld [smem:[#allocation4 + $0x48]]
        %v1142 = vstv %s1141
        %v1143 = vmul.f32 %v1142, %v756
        %v1145 = vrot.slane %v1143, 7
        %v1146 = vrot.slane %v1145, 2
        %1147 = vrot.lane.b32.xlu0 %v1146, 80
        %v1148 = vpop.permute.xlu0 %1147
        %v1149 = vrot.slane %v1148, 2
        %v1150 = vsel %vm810, %v1148, %v1149
        %v1152 = vadd.f32 %v1140, %v1150
        %s1153 = sld [smem:[#allocation4 + $0x1e]]
        %v1154 = vstv %s1153
        %v1155 = vmul.f32 %v1154, %v756
        %1157 = vrot.lane.b32.xlu0 %v1155, 64
        %v1158 = vpop.permute.xlu0 %1157
        %v1159 = vrot.slane %v1158, 2
        %v1160 = vsel %vm833, %v1158, %v1159
        %v1162 = vadd.f32 %v1152, %v1160
        %s1163 = sld [smem:[#allocation4 + $0x4f]]
        %v1164 = vstv %s1163
        %v1165 = vmul.f32 %v1164, %v756
        %v1167 = vrot.slane %v1165, 7
        %v1168 = vrot.slane %v1167, 2
        %1169 = vrot.lane.b32.xlu0 %v1168, 64
        %v1170 = vpop.permute.xlu0 %1169
        %v1171 = vrot.slane %v1170, 2
        %v1172 = vsel %vm833, %v1170, %v1171
        %v1174 = vadd.f32 %v1162, %v1172
        %s1175 = sld [smem:[#allocation4 + $0x25]]
        %v1176 = vstv %s1175
        %v1177 = vmul.f32 %v1176, %v756
        %1179 = vrot.lane.b32.xlu0 %v1177, 48
        %v1180 = vpop.permute.xlu0 %1179
        %v1181 = vrot.slane %v1180, 2
        %v1182 = vsel %vm856, %v1180, %v1181
        %v1184 = vadd.f32 %v1174, %v1182
        %s1185 = sld [smem:[#allocation4 + $0x56]]
        %v1186 = vstv %s1185
        %v1187 = vmul.f32 %v1186, %v756
        %v1189 = vrot.slane %v1187, 7
        %v1190 = vrot.slane %v1189, 2
        %1191 = vrot.lane.b32.xlu0 %v1190, 48
        %v1192 = vpop.permute.xlu0 %1191
        %v1193 = vrot.slane %v1192, 2
        %v1194 = vsel %vm856, %v1192, %v1193
        %v1196 = vadd.f32 %v1184, %v1194
        %s1197 = sld [smem:[#allocation4 + $0x2c]]
        %v1198 = vstv %s1197
        %v1199 = vmul.f32 %v1198, %v756
        %1201 = vrot.lane.b32.xlu0 %v1199, 32
        %v1202 = vpop.permute.xlu0 %1201
        %v1203 = vrot.slane %v1202, 2
        %v1204 = vsel %vm371, %v1202, %v1203
        %v1206 = vadd.f32 %v1196, %v1204
        %s1207 = sld [smem:[#allocation4 + $0x5d]]
        %v1208 = vstv %s1207
        %v1209 = vmul.f32 %v1208, %v756
        %v1211 = vrot.slane %v1209, 7
        %v1212 = vrot.slane %v1211, 2
        %1213 = vrot.lane.b32.xlu0 %v1212, 32
        %v1214 = vpop.permute.xlu0 %1213
        %v1215 = vrot.slane %v1214, 2
        %v1216 = vsel %vm371, %v1214, %v1215
        %v1218 = vadd.f32 %v1206, %v1216
        %s1219 = scalar_lea.vmem %s5, 2
        %v1220 = vld [vmem:[%s1219] ss:$8 sm:$0x3]
        %v1223 = vunpack.c.l.s4 857870592
        %v1224 = vunpack.c.0.s8 %v1223
        %v1225 = vlaneseq
        %v1226 = vshrl.u32 %v1225, 7
        %v1227 = vsub.s32 %v1224, %v1226
        %v1228 = vrot.slane %v1220, %v1227
        %1229 = vrot.lane.b32.xlu0 %v1228, 2
        %v1230 = vpop.permute.xlu0 %1229
        %v1231 = vrot.slane %v1230, 6
        %v1232 = vsel %vm474, %v1231, %v1230
        %v1234 = vmul.f32 %v1218, %v1232
        %1236 = vrot.lane.b32.xlu0 %v1234, 126
        %v1237 = vpop.permute.xlu0 %1236
        %v1238 = vrot.slane %v1237, 2
        %vm1239 = vcmask 1031168
        %v1240 = vsel %vm1239, %v1237, %v1238
        %v1242 = vadd.f32 %v1074, %v1240
        %s1243 = sld [smem:[#allocation4 + $0x3]]
        %v1244 = vstv %s1243
        %v1245 = vmul.f32 %v1244, %v756
        %v1246 = vadd.f32 %v1245, 0.0
        %s1247 = sld [smem:[#allocation4 + $0x34]]
        %v1248 = vstv %s1247
        %v1249 = vmul.f32 %v1248, %v756
        %v1251 = vrot.slane %v1249, 7
        %v1252 = vrot.slane %v1251, 2
        %v1254 = vadd.f32 %v1246, %v1252
        %s1255 = sld [smem:[#allocation4 + $0xa]]
        %v1256 = vstv %s1255
        %v1257 = vmul.f32 %v1256, %v756
        %1259 = vrot.lane.b32.xlu0 %v1257, 112
        %v1260 = vpop.permute.xlu0 %1259
        %v1261 = vrot.slane %v1260, 2
        %v1262 = vsel %vm764, %v1260, %v1261
        %v1264 = vadd.f32 %v1254, %v1262
        %s1265 = sld [smem:[#allocation4 + $0x3b]]
        %v1266 = vstv %s1265
        %v1267 = vmul.f32 %v1266, %v756
        %v1269 = vrot.slane %v1267, 7
        %v1270 = vrot.slane %v1269, 2
        %1271 = vrot.lane.b32.xlu0 %v1270, 112
        %v1272 = vpop.permute.xlu0 %1271
        %v1273 = vrot.slane %v1272, 2
        %v1274 = vsel %vm764, %v1272, %v1273
        %v1276 = vadd.f32 %v1264, %v1274
        %s1277 = sld [smem:[#allocation4 + $0x11]]
        %v1278 = vstv %s1277
        %v1279 = vmul.f32 %v1278, %v756
        %1281 = vrot.lane.b32.xlu0 %v1279, 96
        %v1282 = vpop.permute.xlu0 %1281
        %v1283 = vrot.slane %v1282, 2
        %v1284 = vsel %vm787, %v1282, %v1283
        %v1286 = vadd.f32 %v1276, %v1284
        %s1287 = sld [smem:[#allocation4 + $0x42]]
        %v1288 = vstv %s1287
        %v1289 = vmul.f32 %v1288, %v756
        %v1291 = vrot.slane %v1289, 7
        %v1292 = vrot.slane %v1291, 2
        %1293 = vrot.lane.b32.xlu0 %v1292, 96
        %v1294 = vpop.permute.xlu0 %1293
        %v1295 = vrot.slane %v1294, 2
        %v1296 = vsel %vm787, %v1294, %v1295
        %v1298 = vadd.f32 %v1286, %v1296
        %s1299 = sld [smem:[#allocation4 + $0x18]]
        %v1300 = vstv %s1299
        %v1301 = vmul.f32 %v1300, %v756
        %1303 = vrot.lane.b32.xlu0 %v1301, 80
        %v1304 = vpop.permute.xlu0 %1303
        %v1305 = vrot.slane %v1304, 2
        %v1306 = vsel %vm810, %v1304, %v1305
        %v1308 = vadd.f32 %v1298, %v1306
        %s1309 = sld [smem:[#allocation4 + $0x49]]
        %v1310 = vstv %s1309
        %v1311 = vmul.f32 %v1310, %v756
        %v1313 = vrot.slane %v1311, 7
        %v1314 = vrot.slane %v1313, 2
        %1315 = vrot.lane.b32.xlu0 %v1314, 80
        %v1316 = vpop.permute.xlu0 %1315
        %v1317 = vrot.slane %v1316, 2
        %v1318 = vsel %vm810, %v1316, %v1317
        %v1320 = vadd.f32 %v1308, %v1318
        %s1321 = sld [smem:[#allocation4 + $0x1f]]
        %v1322 = vstv %s1321
        %v1323 = vmul.f32 %v1322, %v756
        %1325 = vrot.lane.b32.xlu0 %v1323, 64
        %v1326 = vpop.permute.xlu0 %1325
        %v1327 = vrot.slane %v1326, 2
        %v1328 = vsel %vm833, %v1326, %v1327
        %v1330 = vadd.f32 %v1320, %v1328
        %s1331 = sld [smem:[#allocation4 + $0x50]]
        %v1332 = vstv %s1331
        %v1333 = vmul.f32 %v1332, %v756
        %v1335 = vrot.slane %v1333, 7
        %v1336 = vrot.slane %v1335, 2
        %1337 = vrot.lane.b32.xlu0 %v1336, 64
        %v1338 = vpop.permute.xlu0 %1337
        %v1339 = vrot.slane %v1338, 2
        %v1340 = vsel %vm833, %v1338, %v1339
        %v1342 = vadd.f32 %v1330, %v1340
        %s1343 = sld [smem:[#allocation4 + $0x26]]
        %v1344 = vstv %s1343
        %v1345 = vmul.f32 %v1344, %v756
        %1347 = vrot.lane.b32.xlu0 %v1345, 48
        %v1348 = vpop.permute.xlu0 %1347
        %v1349 = vrot.slane %v1348, 2
        %v1350 = vsel %vm856, %v1348, %v1349
        %v1352 = vadd.f32 %v1342, %v1350
        %s1353 = sld [smem:[#allocation4 + $0x57]]
        %v1354 = vstv %s1353
        %v1355 = vmul.f32 %v1354, %v756
        %v1357 = vrot.slane %v1355, 7
        %v1358 = vrot.slane %v1357, 2
        %1359 = vrot.lane.b32.xlu0 %v1358, 48
        %v1360 = vpop.permute.xlu0 %1359
        %v1361 = vrot.slane %v1360, 2
        %v1362 = vsel %vm856, %v1360, %v1361
        %v1364 = vadd.f32 %v1352, %v1362
        %s1365 = sld [smem:[#allocation4 + $0x2d]]
        %v1366 = vstv %s1365
        %v1367 = vmul.f32 %v1366, %v756
        %1369 = vrot.lane.b32.xlu0 %v1367, 32
        %v1370 = vpop.permute.xlu0 %1369
        %v1371 = vrot.slane %v1370, 2
        %v1372 = vsel %vm371, %v1370, %v1371
        %v1374 = vadd.f32 %v1364, %v1372
        %s1375 = sld [smem:[#allocation4 + $0x5e]]
        %v1376 = vstv %s1375
        %v1377 = vmul.f32 %v1376, %v756
        %v1379 = vrot.slane %v1377, 7
        %v1380 = vrot.slane %v1379, 2
        %1381 = vrot.lane.b32.xlu0 %v1380, 32
        %v1382 = vpop.permute.xlu0 %1381
        %v1383 = vrot.slane %v1382, 2
        %v1384 = vsel %vm371, %v1382, %v1383
        %v1386 = vadd.f32 %v1374, %v1384
        %s1387 = scalar_lea.vmem %s5, 3
        %v1388 = vld [vmem:[%s1387] ss:$8 sm:$0x3]
        %v1391 = vunpack.c.l.s4 857870592
        %v1392 = vunpack.c.0.s8 %v1391
        %v1393 = vlaneseq
        %v1394 = vshrl.u32 %v1393, 7
        %v1395 = vsub.s32 %v1392, %v1394
        %v1396 = vrot.slane %v1388, %v1395
        %1397 = vrot.lane.b32.xlu0 %v1396, 3
        %v1398 = vpop.permute.xlu0 %1397
        %v1399 = vrot.slane %v1398, 6
        %vm1400 = vcmask 23552
        %v1401 = vsel %vm1400, %v1399, %v1398
        %v1403 = vmul.f32 %v1386, %v1401
        %1405 = vrot.lane.b32.xlu0 %v1403, 125
        %v1406 = vpop.permute.xlu0 %1405
        %v1407 = vrot.slane %v1406, 2
        %vm1408 = vcmask 1022976
        %v1409 = vsel %vm1408, %v1406, %v1407
        %v1411 = vadd.f32 %v1242, %v1409
        %s1412 = sld [smem:[#allocation4 + $0x4]]
        %v1413 = vstv %s1412
        %v1414 = vmul.f32 %v1413, %v756
        %v1415 = vadd.f32 %v1414, 0.0
        %s1416 = sld [smem:[#allocation4 + $0x35]]
        %v1417 = vstv %s1416
        %v1418 = vmul.f32 %v1417, %v756
        %v1420 = vrot.slane %v1418, 7
        %v1421 = vrot.slane %v1420, 2
        %v1423 = vadd.f32 %v1415, %v1421
        %s1424 = sld [smem:[#allocation4 + $0xb]]
        %v1425 = vstv %s1424
        %v1426 = vmul.f32 %v1425, %v756
        %1428 = vrot.lane.b32.xlu0 %v1426, 112
        %v1429 = vpop.permute.xlu0 %1428
        %v1430 = vrot.slane %v1429, 2
        %v1431 = vsel %vm764, %v1429, %v1430
        %v1433 = vadd.f32 %v1423, %v1431
        %s1434 = sld [smem:[#allocation4 + $0x3c]]
        %v1435 = vstv %s1434
        %v1436 = vmul.f32 %v1435, %v756
        %v1438 = vrot.slane %v1436, 7
        %v1439 = vrot.slane %v1438, 2
        %1440 = vrot.lane.b32.xlu0 %v1439, 112
        %v1441 = vpop.permute.xlu0 %1440
        %v1442 = vrot.slane %v1441, 2
        %v1443 = vsel %vm764, %v1441, %v1442
        %v1445 = vadd.f32 %v1433, %v1443
        %s1446 = sld [smem:[#allocation4 + $0x12]]
        %v1447 = vstv %s1446
        %v1448 = vmul.f32 %v1447, %v756
        %1450 = vrot.lane.b32.xlu0 %v1448, 96
        %v1451 = vpop.permute.xlu0 %1450
        %v1452 = vrot.slane %v1451, 2
        %v1453 = vsel %vm787, %v1451, %v1452
        %v1455 = vadd.f32 %v1445, %v1453
        %s1456 = sld [smem:[#allocation4 + $0x43]]
        %v1457 = vstv %s1456
        %v1458 = vmul.f32 %v1457, %v756
        %v1460 = vrot.slane %v1458, 7
        %v1461 = vrot.slane %v1460, 2
        %1462 = vrot.lane.b32.xlu0 %v1461, 96
        %v1463 = vpop.permute.xlu0 %1462
        %v1464 = vrot.slane %v1463, 2
        %v1465 = vsel %vm787, %v1463, %v1464
        %v1467 = vadd.f32 %v1455, %v1465
        %s1468 = sld [smem:[#allocation4 + $0x19]]
        %v1469 = vstv %s1468
        %v1470 = vmul.f32 %v1469, %v756
        %1472 = vrot.lane.b32.xlu0 %v1470, 80
        %v1473 = vpop.permute.xlu0 %1472
        %v1474 = vrot.slane %v1473, 2
        %v1475 = vsel %vm810, %v1473, %v1474
        %v1477 = vadd.f32 %v1467, %v1475
        %s1478 = sld [smem:[#allocation4 + $0x4a]]
        %v1479 = vstv %s1478
        %v1480 = vmul.f32 %v1479, %v756
        %v1482 = vrot.slane %v1480, 7
        %v1483 = vrot.slane %v1482, 2
        %1484 = vrot.lane.b32.xlu0 %v1483, 80
        %v1485 = vpop.permute.xlu0 %1484
        %v1486 = vrot.slane %v1485, 2
        %v1487 = vsel %vm810, %v1485, %v1486
        %v1489 = vadd.f32 %v1477, %v1487
        %s1490 = sld [smem:[#allocation4 + $0x20]]
        %v1491 = vstv %s1490
        %v1492 = vmul.f32 %v1491, %v756
        %1494 = vrot.lane.b32.xlu0 %v1492, 64
        %v1495 = vpop.permute.xlu0 %1494
        %v1496 = vrot.slane %v1495, 2
        %v1497 = vsel %vm833, %v1495, %v1496
        %v1499 = vadd.f32 %v1489, %v1497
        %s1500 = sld [smem:[#allocation4 + $0x51]]
        %v1501 = vstv %s1500
        %v1502 = vmul.f32 %v1501, %v756
        %v1504 = vrot.slane %v1502, 7
        %v1505 = vrot.slane %v1504, 2
        %1506 = vrot.lane.b32.xlu0 %v1505, 64
        %v1507 = vpop.permute.xlu0 %1506
        %v1508 = vrot.slane %v1507, 2
        %v1509 = vsel %vm833, %v1507, %v1508
        %v1511 = vadd.f32 %v1499, %v1509
        %s1512 = sld [smem:[#allocation4 + $0x27]]
        %v1513 = vstv %s1512
        %v1514 = vmul.f32 %v1513, %v756
        %1516 = vrot.lane.b32.xlu0 %v1514, 48
        %v1517 = vpop.permute.xlu0 %1516
        %v1518 = vrot.slane %v1517, 2
        %v1519 = vsel %vm856, %v1517, %v1518
        %v1521 = vadd.f32 %v1511, %v1519
        %s1522 = sld [smem:[#allocation4 + $0x58]]
        %v1523 = vstv %s1522
        %v1524 = vmul.f32 %v1523, %v756
        %v1526 = vrot.slane %v1524, 7
        %v1527 = vrot.slane %v1526, 2
        %1528 = vrot.lane.b32.xlu0 %v1527, 48
        %v1529 = vpop.permute.xlu0 %1528
        %v1530 = vrot.slane %v1529, 2
        %v1531 = vsel %vm856, %v1529, %v1530
        %v1533 = vadd.f32 %v1521, %v1531
        %s1534 = sld [smem:[#allocation4 + $0x2e]]
        %v1535 = vstv %s1534
        %v1536 = vmul.f32 %v1535, %v756
        %1538 = vrot.lane.b32.xlu0 %v1536, 32
        %v1539 = vpop.permute.xlu0 %1538
        %v1540 = vrot.slane %v1539, 2
        %v1541 = vsel %vm371, %v1539, %v1540
        %v1543 = vadd.f32 %v1533, %v1541
        %s1544 = sld [smem:[#allocation4 + $0x5f]]
        %v1545 = vstv %s1544
        %v1546 = vmul.f32 %v1545, %v756
        %v1548 = vrot.slane %v1546, 7
        %v1549 = vrot.slane %v1548, 2
        %1550 = vrot.lane.b32.xlu0 %v1549, 32
        %v1551 = vpop.permute.xlu0 %1550
        %v1552 = vrot.slane %v1551, 2
        %v1553 = vsel %vm371, %v1551, %v1552
        %v1555 = vadd.f32 %v1543, %v1553
        %s1556 = scalar_lea.vmem %s5, 4
        %v1557 = vld [vmem:[%s1556] ss:$8 sm:$0x3]
        %v1560 = vunpack.c.l.s4 857870592
        %v1561 = vunpack.c.0.s8 %v1560
        %v1562 = vlaneseq
        %v1563 = vshrl.u32 %v1562, 7
        %v1564 = vsub.s32 %v1561, %v1563
        %v1565 = vrot.slane %v1557, %v1564
        %1566 = vrot.lane.b32.xlu0 %v1565, 4
        %v1567 = vpop.permute.xlu0 %1566
        %v1568 = vrot.slane %v1567, 6
        %vm1569 = vcmask 31744
        %v1570 = vsel %vm1569, %v1568, %v1567
        %v1572 = vmul.f32 %v1555, %v1570
        %1574 = vrot.lane.b32.xlu0 %v1572, 124
        %v1575 = vpop.permute.xlu0 %1574
        %v1576 = vrot.slane %v1575, 2
        %vm1577 = vcmask 1014784
        %v1578 = vsel %vm1577, %v1575, %v1576
        %v1580 = vadd.f32 %v1411, %v1578
        %s1581 = sld [smem:[#allocation4 + $0x5]]
        %v1582 = vstv %s1581
        %v1583 = vmul.f32 %v1582, %v756
        %v1584 = vadd.f32 %v1583, 0.0
        %s1585 = sld [smem:[#allocation4 + $0x36]]
        %v1586 = vstv %s1585
        %v1587 = vmul.f32 %v1586, %v756
        %v1589 = vrot.slane %v1587, 7
        %v1590 = vrot.slane %v1589, 2
        %v1592 = vadd.f32 %v1584, %v1590
        %s1593 = sld [smem:[#allocation4 + $0xc]]
        %v1594 = vstv %s1593
        %v1595 = vmul.f32 %v1594, %v756
        %1597 = vrot.lane.b32.xlu0 %v1595, 112
        %v1598 = vpop.permute.xlu0 %1597
        %v1599 = vrot.slane %v1598, 2
        %v1600 = vsel %vm764, %v1598, %v1599
        %v1602 = vadd.f32 %v1592, %v1600
        %s1603 = sld [smem:[#allocation4 + $0x3d]]
        %v1604 = vstv %s1603
        %v1605 = vmul.f32 %v1604, %v756
        %v1607 = vrot.slane %v1605, 7
        %v1608 = vrot.slane %v1607, 2
        %1609 = vrot.lane.b32.xlu0 %v1608, 112
        %v1610 = vpop.permute.xlu0 %1609
        %v1611 = vrot.slane %v1610, 2
        %v1612 = vsel %vm764, %v1610, %v1611
        %v1614 = vadd.f32 %v1602, %v1612
        %s1615 = sld [smem:[#allocation4 + $0x13]]
        %v1616 = vstv %s1615
        %v1617 = vmul.f32 %v1616, %v756
        %1619 = vrot.lane.b32.xlu0 %v1617, 96
        %v1620 = vpop.permute.xlu0 %1619
        %v1621 = vrot.slane %v1620, 2
        %v1622 = vsel %vm787, %v1620, %v1621
        %v1624 = vadd.f32 %v1614, %v1622
        %s1625 = sld [smem:[#allocation4 + $0x44]]
        %v1626 = vstv %s1625
        %v1627 = vmul.f32 %v1626, %v756
        %v1629 = vrot.slane %v1627, 7
        %v1630 = vrot.slane %v1629, 2
        %1631 = vrot.lane.b32.xlu0 %v1630, 96
        %v1632 = vpop.permute.xlu0 %1631
        %v1633 = vrot.slane %v1632, 2
        %v1634 = vsel %vm787, %v1632, %v1633
        %v1636 = vadd.f32 %v1624, %v1634
        %s1637 = sld [smem:[#allocation4 + $0x1a]]
        %v1638 = vstv %s1637
        %v1639 = vmul.f32 %v1638, %v756
        %1641 = vrot.lane.b32.xlu0 %v1639, 80
        %v1642 = vpop.permute.xlu0 %1641
        %v1643 = vrot.slane %v1642, 2
        %v1644 = vsel %vm810, %v1642, %v1643
        %v1646 = vadd.f32 %v1636, %v1644
        %s1647 = sld [smem:[#allocation4 + $0x4b]]
        %v1648 = vstv %s1647
        %v1649 = vmul.f32 %v1648, %v756
        %v1651 = vrot.slane %v1649, 7
        %v1652 = vrot.slane %v1651, 2
        %1653 = vrot.lane.b32.xlu0 %v1652, 80
        %v1654 = vpop.permute.xlu0 %1653
        %v1655 = vrot.slane %v1654, 2
        %v1656 = vsel %vm810, %v1654, %v1655
        %v1658 = vadd.f32 %v1646, %v1656
        %s1659 = sld [smem:[#allocation4 + $0x21]]
        %v1660 = vstv %s1659
        %v1661 = vmul.f32 %v1660, %v756
        %1663 = vrot.lane.b32.xlu0 %v1661, 64
        %v1664 = vpop.permute.xlu0 %1663
        %v1665 = vrot.slane %v1664, 2
        %v1666 = vsel %vm833, %v1664, %v1665
        %v1668 = vadd.f32 %v1658, %v1666
        %s1669 = sld [smem:[#allocation4 + $0x52]]
        %v1670 = vstv %s1669
        %v1671 = vmul.f32 %v1670, %v756
        %v1673 = vrot.slane %v1671, 7
        %v1674 = vrot.slane %v1673, 2
        %1675 = vrot.lane.b32.xlu0 %v1674, 64
        %v1676 = vpop.permute.xlu0 %1675
        %v1677 = vrot.slane %v1676, 2
        %v1678 = vsel %vm833, %v1676, %v1677
        %v1680 = vadd.f32 %v1668, %v1678
        %s1681 = sld [smem:[#allocation4 + $0x28]]
        %v1682 = vstv %s1681
        %v1683 = vmul.f32 %v1682, %v756
        %1685 = vrot.lane.b32.xlu0 %v1683, 48
        %v1686 = vpop.permute.xlu0 %1685
        %v1687 = vrot.slane %v1686, 2
        %v1688 = vsel %vm856, %v1686, %v1687
        %v1690 = vadd.f32 %v1680, %v1688
        %s1691 = sld [smem:[#allocation4 + $0x59]]
        %v1692 = vstv %s1691
        %v1693 = vmul.f32 %v1692, %v756
        %v1695 = vrot.slane %v1693, 7
        %v1696 = vrot.slane %v1695, 2
        %1697 = vrot.lane.b32.xlu0 %v1696, 48
        %v1698 = vpop.permute.xlu0 %1697
        %v1699 = vrot.slane %v1698, 2
        %v1700 = vsel %vm856, %v1698, %v1699
        %v1702 = vadd.f32 %v1690, %v1700
        %s1703 = sld [smem:[#allocation4 + $0x2f]]
        %v1704 = vstv %s1703
        %v1705 = vmul.f32 %v1704, %v756
        %1707 = vrot.lane.b32.xlu0 %v1705, 32
        %v1708 = vpop.permute.xlu0 %1707
        %v1709 = vrot.slane %v1708, 2
        %v1710 = vsel %vm371, %v1708, %v1709
        %v1712 = vadd.f32 %v1702, %v1710
        %s1713 = sld [smem:[#allocation4 + $0x60]]
        %v1714 = vstv %s1713
        %v1715 = vmul.f32 %v1714, %v756
        %v1717 = vrot.slane %v1715, 7
        %v1718 = vrot.slane %v1717, 2
        %1719 = vrot.lane.b32.xlu0 %v1718, 32
        %v1720 = vpop.permute.xlu0 %1719
        %v1721 = vrot.slane %v1720, 2
        %v1722 = vsel %vm371, %v1720, %v1721
        %v1724 = vadd.f32 %v1712, %v1722
        %s1725 = scalar_lea.vmem %s5, 5
        %v1726 = vld [vmem:[%s1725] ss:$8 sm:$0x3]
        %v1729 = vunpack.c.l.s4 857870592
        %v1730 = vunpack.c.0.s8 %v1729
        %v1731 = vlaneseq
        %v1732 = vshrl.u32 %v1731, 7
        %v1733 = vsub.s32 %v1730, %v1732
        %v1734 = vrot.slane %v1726, %v1733
        %1735 = vrot.lane.b32.xlu0 %v1734, 5
        %v1736 = vpop.permute.xlu0 %1735
        %v1737 = vrot.slane %v1736, 6
        %vm1738 = vcmask 39936
        %v1739 = vsel %vm1738, %v1737, %v1736
        %v1741 = vmul.f32 %v1724, %v1739
        %1743 = vrot.lane.b32.xlu0 %v1741, 123
        %v1744 = vpop.permute.xlu0 %1743
        %v1745 = vrot.slane %v1744, 2
        %vm1746 = vcmask 1006592
        %v1747 = vsel %vm1746, %v1744, %v1745
        %v1749 = vadd.f32 %v1580, %v1747
        %s1750 = sld [smem:[#allocation4 + $0x6]]
        %v1751 = vstv %s1750
        %v1752 = vmul.f32 %v1751, %v756
        %v1753 = vadd.f32 %v1752, 0.0
        %s1754 = sld [smem:[#allocation4 + $0x37]]
        %v1755 = vstv %s1754
        %v1756 = vmul.f32 %v1755, %v756
        %v1758 = vrot.slane %v1756, 7
        %v1759 = vrot.slane %v1758, 2
        %v1761 = vadd.f32 %v1753, %v1759
        %s1762 = sld [smem:[#allocation4 + $0xd]]
        %v1763 = vstv %s1762
        %v1764 = vmul.f32 %v1763, %v756
        %1766 = vrot.lane.b32.xlu0 %v1764, 112
        %v1767 = vpop.permute.xlu0 %1766
        %v1768 = vrot.slane %v1767, 2
        %v1769 = vsel %vm764, %v1767, %v1768
        %v1771 = vadd.f32 %v1761, %v1769
        %s1772 = sld [smem:[#allocation4 + $0x3e]]
        %v1773 = vstv %s1772
        %v1774 = vmul.f32 %v1773, %v756
        %v1776 = vrot.slane %v1774, 7
        %v1777 = vrot.slane %v1776, 2
        %1778 = vrot.lane.b32.xlu0 %v1777, 112
        %v1779 = vpop.permute.xlu0 %1778
        %v1780 = vrot.slane %v1779, 2
        %v1781 = vsel %vm764, %v1779, %v1780
        %v1783 = vadd.f32 %v1771, %v1781
        %s1784 = sld [smem:[#allocation4 + $0x14]]
        %v1785 = vstv %s1784
        %v1786 = vmul.f32 %v1785, %v756
        %1788 = vrot.lane.b32.xlu0 %v1786, 96
        %v1789 = vpop.permute.xlu0 %1788
        %v1790 = vrot.slane %v1789, 2
        %v1791 = vsel %vm787, %v1789, %v1790
        %v1793 = vadd.f32 %v1783, %v1791
        %s1794 = sld [smem:[#allocation4 + $0x45]]
        %v1795 = vstv %s1794
        %v1796 = vmul.f32 %v1795, %v756
        %v1798 = vrot.slane %v1796, 7
        %v1799 = vrot.slane %v1798, 2
        %1800 = vrot.lane.b32.xlu0 %v1799, 96
        %v1801 = vpop.permute.xlu0 %1800
        %v1802 = vrot.slane %v1801, 2
        %v1803 = vsel %vm787, %v1801, %v1802
        %v1805 = vadd.f32 %v1793, %v1803
        %s1806 = sld [smem:[#allocation4 + $0x1b]]
        %v1807 = vstv %s1806
        %v1808 = vmul.f32 %v1807, %v756
        %1810 = vrot.lane.b32.xlu0 %v1808, 80
        %v1811 = vpop.permute.xlu0 %1810
        %v1812 = vrot.slane %v1811, 2
        %v1813 = vsel %vm810, %v1811, %v1812
        %v1815 = vadd.f32 %v1805, %v1813
        %s1816 = sld [smem:[#allocation4 + $0x4c]]
        %v1817 = vstv %s1816
        %v1818 = vmul.f32 %v1817, %v756
        %v1820 = vrot.slane %v1818, 7
        %v1821 = vrot.slane %v1820, 2
        %1822 = vrot.lane.b32.xlu0 %v1821, 80
        %v1823 = vpop.permute.xlu0 %1822
        %v1824 = vrot.slane %v1823, 2
        %v1825 = vsel %vm810, %v1823, %v1824
        %v1827 = vadd.f32 %v1815, %v1825
        %s1828 = sld [smem:[#allocation4 + $0x22]]
        %v1829 = vstv %s1828
        %v1830 = vmul.f32 %v1829, %v756
        %1832 = vrot.lane.b32.xlu0 %v1830, 64
        %v1833 = vpop.permute.xlu0 %1832
        %v1834 = vrot.slane %v1833, 2
        %v1835 = vsel %vm833, %v1833, %v1834
        %v1837 = vadd.f32 %v1827, %v1835
        %s1838 = sld [smem:[#allocation4 + $0x53]]
        %v1839 = vstv %s1838
        %v1840 = vmul.f32 %v1839, %v756
        %v1842 = vrot.slane %v1840, 7
        %v1843 = vrot.slane %v1842, 2
        %1844 = vrot.lane.b32.xlu0 %v1843, 64
        %v1845 = vpop.permute.xlu0 %1844
        %v1846 = vrot.slane %v1845, 2
        %v1847 = vsel %vm833, %v1845, %v1846
        %v1849 = vadd.f32 %v1837, %v1847
        %s1850 = sld [smem:[#allocation4 + $0x29]]
        %v1851 = vstv %s1850
        %v1852 = vmul.f32 %v1851, %v756
        %1854 = vrot.lane.b32.xlu0 %v1852, 48
        %v1855 = vpop.permute.xlu0 %1854
        %v1856 = vrot.slane %v1855, 2
        %v1857 = vsel %vm856, %v1855, %v1856
        %v1859 = vadd.f32 %v1849, %v1857
        %s1860 = sld [smem:[#allocation4 + $0x5a]]
        %v1861 = vstv %s1860
        %v1862 = vmul.f32 %v1861, %v756
        %v1864 = vrot.slane %v1862, 7
        %v1865 = vrot.slane %v1864, 2
        %1866 = vrot.lane.b32.xlu0 %v1865, 48
        %v1867 = vpop.permute.xlu0 %1866
        %v1868 = vrot.slane %v1867, 2
        %v1869 = vsel %vm856, %v1867, %v1868
        %v1871 = vadd.f32 %v1859, %v1869
        %s1872 = sld [smem:[#allocation4 + $0x30]]
        %v1873 = vstv %s1872
        %v1874 = vmul.f32 %v1873, %v756
        %1876 = vrot.lane.b32.xlu0 %v1874, 32
        %v1877 = vpop.permute.xlu0 %1876
        %v1878 = vrot.slane %v1877, 2
        %v1879 = vsel %vm371, %v1877, %v1878
        %v1881 = vadd.f32 %v1871, %v1879
        %s1882 = sld [smem:[#allocation4 + $0x61]]
        %v1883 = vstv %s1882
        %v1884 = vmul.f32 %v1883, %v756
        %v1886 = vrot.slane %v1884, 7
        %v1887 = vrot.slane %v1886, 2
        %1888 = vrot.lane.b32.xlu0 %v1887, 32
        %v1889 = vpop.permute.xlu0 %1888
        %v1890 = vrot.slane %v1889, 2
        %v1891 = vsel %vm371, %v1889, %v1890
        %v1893 = vadd.f32 %v1881, %v1891
        %s1894 = scalar_lea.vmem %s5, 6
        %v1895 = vld [vmem:[%s1894] ss:$8 sm:$0x3]
        %v1898 = vunpack.c.l.s4 857870592
        %v1899 = vunpack.c.0.s8 %v1898
        %v1900 = vlaneseq
        %v1901 = vshrl.u32 %v1900, 7
        %v1902 = vsub.s32 %v1899, %v1901
        %v1903 = vrot.slane %v1895, %v1902
        %1904 = vrot.lane.b32.xlu0 %v1903, 6
        %v1905 = vpop.permute.xlu0 %1904
        %v1906 = vrot.slane %v1905, 6
        %vm1907 = vcmask 48128
        %v1908 = vsel %vm1907, %v1906, %v1905
        %v1910 = vmul.f32 %v1893, %v1908
        %1912 = vrot.lane.b32.xlu0 %v1910, 122
        %v1913 = vpop.permute.xlu0 %1912
        %v1914 = vrot.slane %v1913, 2
        %vm1915 = vcmask 998400
        %v1916 = vsel %vm1915, %v1913, %v1914
        %v1918 = vadd.f32 %v1749, %v1916
        %s1919 = sld [smem:[#allocation3]]
        %v1920 = vstv %s1919
        %v1921 = vadd.f32 %v1918, %v1920
        %v1922 = vxor.u32 %v1921, 2147483648
        %v1923 = vmul.f32 %v1922, 1.442695
        %v1924 = vpow.pop %v1923
        %v1925 = vadd.f32 %v1924, 1.0
        %v1926 = vrcp.pop %v1925
        %v1927 = vmul.f32 1.0, %v1926
        %v1929 = vlaneseq
        %v1930 = vshrl.u32 %v1929, 7
        %v1931 = vsub.s32 0, %v1930
        %v1932 = vrot.slane %v1927, %v1931
        %v1933 = vlaneseq
        %v1934 = vshrl.u32 %v1933, 7
        %v1935 = vsub.s32 2, %v1934
        %v1936 = vrot.slane %v1927, %v1935
        %v1939 = vlaneseq
        %v1940 = vshrl.u32 %v1939, 7
        %v1941 = vsub.s32 0, %v1940
        %v1942 = vrot.slane %v1932, %v1941
        %v1943 = vlaneseq
        %v1944 = vshrl.u32 %v1943, 7
        %v1945 = vsub.s32 0, %v1944
        %v1946 = vrot.slane %v1936, %v1945
        %v1947 = vmul.f32 %v640, %v1942
        %v1948 = vmul.f32 %v641, %v1946
        %v1949 = vmul.f32 %v642, %v1942
        %v1950 = vmul.f32 %v643, %v1946
        %v1951 = vmul.f32 %v644, %v1942
        %v1952 = vmul.f32 %v645, %v1946
        %v1953 = vmul.f32 %v646, %v1942
        %v1954 = vmul.f32 %v647, %v1946
        %1955 = vst [vmem:[%s320] sm:$0xff] %v1947
        %1956 = vst [vmem:[%s320 + $0x8] sm:$0xff] %v1948
        %1957 = vst [vmem:[%s320 + $0x10] sm:$0xff] %v1949
        %1958 = vst [vmem:[%s320 + $0x18] sm:$0xff] %v1950
        %1959 = vst [vmem:[%s320 + $0x20] sm:$0xff] %v1951
        %1960 = vst [vmem:[%s320 + $0x28] sm:$0xff] %v1952
        %1961 = vst [vmem:[%s320 + $0x30] sm:$0xff] %v1953
        %1962 = vst [vmem:[%s320 + $0x38] sm:$0xff] %v1954
        %p1963 = scmp.lt.s32.totalorder %s21, 1
        %s1964 = scalar_select %p1963, %s21, 1
        %s1965 = smul.addr %s1964, 8
        %s1966 = smul.addr %s1965, 8
        %s1967 = scalar_lea.vmem %s8, %s1966
        // Predicated region
        $region57: #{cbam_forward.1} parent=51 // pred_check
          %p1968 = pneg %p212
        $region58: #{cbam_forward.1} parent=51 // pred_check_branch
          %1970 = sbr.rel (%p1968) target = $region60
        $region59: #{cbam_forward.1} parent=51 // pred_region
          _
        $region60: #{cbam_forward.1} parent=51 // pred_fallthru
          _
      $region52: #{cbam_forward.1} parent=5 // pred_fallthru
        _
      %p1971 = scmp.le.s32.totalorder 2, %s16
      // Predicated region
      $region61: #{cbam_forward.1} parent=5 // pred_check
        %p1972 = pneg %p1971
      $region62: #{cbam_forward.1} parent=5 // pred_check_branch
        %1974 = sbr.rel (%p1972) target = $region64
      $region63: #{cbam_forward.1} parent=5 // pred_region
        %s1975 = ssub.s32 %s16, 2
        // Predicated region
        $region65: #{cbam_forward.1} parent=63 // pred_check
          %p1976 = pneg %p218
        $region66: #{cbam_forward.1} parent=63 // pred_check_branch
          %1978 = sbr.rel (%p1976) target = $region68
        $region67: #{cbam_forward.1} parent=63 // pred_region
          %p1979 = scmp.lt.s32.totalorder %s22, 1
          %s1980 = scalar_select %p1979, %s22, 1
          %s1981 = smul.addr %s1980, 8
          %s1982 = smul.addr %s1981, 8
          %s1983 = scalar_lea.vmem %s8, %s1982
        $region68: #{cbam_forward.1} parent=63 // pred_fallthru
          _
      $region64: #{cbam_forward.1} parent=5 // pred_fallthru
        _
    $region6: #{cbam_forward.1} parent=1 // loop_footer
      %s20 = sadd.s32 1, %s16
    $region7: #{cbam_forward.1} parent=1 // loop_footer_branch
      %15 = sbr.rel target = $region3
    $region8: #{cbam_forward.1} parent=1 // loop_exit
      _
    %1984 = vsyncpa [#allocation5], 1
    %s1985 = scalar_lea.sflag [#allocation5], 1
    %1986 = vsyncpa %s1985, 1

</llo_original>
